<compile_context>
chip_gen: v5e
topology: v5e:2x2
jax: 0.10.0
libtpu: 0.0.40
codegen_flags: <defaults>
</compile_context>

<pallas_src>
import jax
import jax.numpy as jnp
from jax.experimental import pallas as pl
from jax.experimental.pallas import tpu as pltpu


# ---------------------------------------------------------------------------
# Fused kernel factory: Conv1d+ReLU+MaxPool -> LSTM -> Linear -> Softmax
# ---------------------------------------------------------------------------
def _make_kernel(B, B_pad, L, T, C_in, C_out, H, NC):
    def kernel(x_ref, w_ref, b_ref, wih_ref, whh_ref, bg_ref, wfc_ref, bfc_ref, out_ref):
        # x_ref:   (L*Bp, 3*C_in) bf16   im2col slab, row = l*Bp + b, taps concat on channels
        # w_ref:   (3*C_in, C_out) bf16  conv weight, row = k*C_in + c (matches im2col order)
        # b_ref:   (1, C_out) f32        conv bias
        # wih_ref: (C_out, 4H) bf16      input->gates, gate order [i, f, o, g]
        # whh_ref: (H, 4H) bf16          hidden->gates, gate order [i, f, o, g]
        # bg_ref:  (1, 4H) f32           combined LSTM bias (b_ih + b_hh), [i, f, o, g]
        # wfc_ref: (NC, H) f32           fc weight, transposed for VPU dot
        # bfc_ref: (1, NC) f32
        # out_ref: (B, NC) f32           class probabilities (real batch only)

        # ---- Conv1d(k=3, pad=1) + bias + ReLU as a single im2col MXU matmul.
        acc = jnp.dot(x_ref[...], w_ref[...], preferred_element_type=jnp.float32)
        acc = jnp.maximum(acc + b_ref[...], 0.0)                       # (L*Bp, C_out) f32

        # ---- MaxPool1d(2): rows are time-major (l, b); pair l=2t with l=2t+1.
        #      With Bp a multiple of 8 both halves of each (2*Bp)-row group are tile-aligned.
        acc3 = acc.reshape(T, 2 * B_pad, C_out)
        pooled = jnp.maximum(acc3[:, :B_pad, :], acc3[:, B_pad:, :])   # (T, Bp, C_out)

        # ---- LSTM: hoist the input->gate projection (+ combined bias) out of the recurrence.
        seq = pooled.reshape(T * B_pad, C_out).astype(jnp.bfloat16)
        xproj = (jnp.dot(seq, wih_ref[...], preferred_element_type=jnp.float32)
                 + bg_ref[...]).reshape(T, B_pad, 4 * H)               # (T, Bp, 4H) f32

        whh = whh_ref[...]
        h = jnp.zeros((B_pad, H), jnp.float32)
        c = jnp.zeros((B_pad, H), jnp.float32)
        # T is small & static -> fully unroll so EUP/VPU gate math overlaps the next step's
        # recurrent MXU push. Gate order is [i, f, o, g]: one sigmoid over the first 3H.
        for t in range(T):
            gates = xproj[t] + jnp.dot(h.astype(jnp.bfloat16), whh,
                                       preferred_element_type=jnp.float32)  # (Bp, 4H)
            sig = jax.nn.sigmoid(gates[:, 0:3 * H])
            i_g = sig[:, 0:H]
            f_g = sig[:, H:2 * H]
            o_g = sig[:, 2 * H:3 * H]
            g_g = jnp.tanh(gates[:, 3 * H:4 * H])
            c = f_g * c + i_g * g_g
            h = o_g * jnp.tanh(c)

        # ---- Linear(H -> NC) on the VPU/XLU: broadcast-multiply + lane reduce per class.
        #      Avoids an MXU 128-row weight load + pop for only NC=2 useful output columns.
        wfc_t = wfc_ref[...]                                           # (NC, H) f32
        cols = [jnp.sum(h * wfc_t[j:j + 1, :], axis=1, keepdims=True) for j in range(NC)]
        logits = jnp.concatenate(cols, axis=1) + bfc_ref[...]          # (Bp, NC)

        # ---- softmax(dim=1); store only the real batch rows.
        m = jnp.max(logits, axis=1, keepdims=True)
        e = jnp.exp(logits - m)
        inv = pl.reciprocal(jnp.sum(e, axis=1, keepdims=True), approx=True)
        out_ref[...] = (e * inv)[:B, :]

    return kernel


def _permute_gates_ifog(w, H):
    """PyTorch LSTM gate order [i, f, g, o] -> [i, f, o, g] along the last axis."""
    return jnp.concatenate([w[..., 0:2 * H], w[..., 3 * H:4 * H], w[..., 2 * H:3 * H]],
                           axis=-1)


# ---------------------------------------------------------------------------
# Wrapper
# ---------------------------------------------------------------------------
def cnn_lstm_forward(x, params):
    """x: (B, C_in, L) float32 (PyTorch NCL). Returns (B, num_classes) probabilities."""
    B, C_in, L = x.shape
    C_out = params["conv_w"].shape[-1]
    H = params["whh"].shape[0]
    NC = params["wfc"].shape[-1]
    T = L // 2
    B_pad = ((B + 7) // 8) * 8

    # Host-side glue (tiny): time-major, pad batch->B_pad and length by 1 each side in one
    # jnp.pad, then im2col (3 shifted taps concatenated along channels), flatten, bf16.
    x_lbc = jnp.transpose(x, (2, 0, 1))                                # (L, B, C_in)
    x_p = jnp.pad(x_lbc, ((1, 1), (0, B_pad - B), (0, 0)))             # (L+2, Bp, C_in)
    x_cat = jnp.concatenate([x_p[0:L], x_p[1:L + 1], x_p[2:L + 2]], axis=-1)
    x_flat = x_cat.reshape(L * B_pad, 3 * C_in).astype(jnp.bfloat16)

    # bf16 MXU operands; biases, fc weight and accumulation stay f32.
    conv_w = params["conv_w"].reshape(3 * C_in, C_out).astype(jnp.bfloat16)
    wih = _permute_gates_ifog(params["wih"], H).astype(jnp.bfloat16)
    whh = _permute_gates_ifog(params["whh"], H).astype(jnp.bfloat16)
    bg = _permute_gates_ifog(params["b"], H)
    wfc_t = jnp.transpose(params["wfc"])                               # (NC, H) f32

    kernel = _make_kernel(B, B_pad, L, T, C_in, C_out, H, NC)
    return pl.pallas_call(
        kernel,
        out_shape=jax.ShapeDtypeStruct((B, NC), jnp.float32),
        grid=(1,),
        in_specs=[
            pl.BlockSpec((L * B_pad, 3 * C_in), lambda i: (0, 0)),
            pl.BlockSpec((3 * C_in, C_out), lambda i: (0, 0)),
            pl.BlockSpec((1, C_out), lambda i: (0, 0)),
            pl.BlockSpec((C_out, 4 * H), lambda i: (0, 0)),
            pl.BlockSpec((H, 4 * H), lambda i: (0, 0)),
            pl.BlockSpec((1, 4 * H), lambda i: (0, 0)),
            pl.BlockSpec((NC, H), lambda i: (0, 0)),
            pl.BlockSpec((1, NC), lambda i: (0, 0)),
        ],
        out_specs=pl.BlockSpec((B, NC), lambda i: (0, 0)),
        compiler_params=pltpu.CompilerParams(dimension_semantics=("arbitrary",)),
    )(x_flat, conv_w, params["conv_b"], wih, whh, bg, wfc_t, params["bfc"])


# ---------------------------------------------------------------------------
# Pure-JAX reference (f32, PyTorch [i,f,g,o] gate order) for correctness checking
# ---------------------------------------------------------------------------
def cnn_lstm_reference(x, params):
    B, C_in, L = x.shape
    H = params["whh"].shape[0]
    T = L // 2
    w = params["conv_w"]                                               # (3, C_in, C_out)
    x_blc = jnp.transpose(x, (0, 2, 1))                                # (B, L, C_in)
    x_pad = jnp.pad(x_blc, ((0, 0), (1, 1), (0, 0)))
    conv = (jnp.einsum("blc,co->blo", x_pad[:, 0:L], w[0])
            + jnp.einsum("blc,co->blo", x_pad[:, 1:L + 1], w[1])
            + jnp.einsum("blc,co->blo", x_pad[:, 2:L + 2], w[2])
            + params["conv_b"])
    conv = jnp.maximum(conv, 0.0)
    pooled = jnp.maximum(conv[:, 0::2], conv[:, 1::2])                 # (B, T, C_out)

    h = jnp.zeros((B, H), jnp.float32)
    c = jnp.zeros((B, H), jnp.float32)
    for t in range(T):
        gates = pooled[:, t] @ params["wih"] + h @ params["whh"] + params["b"]
        i_g = jax.nn.sigmoid(gates[:, 0:H])
        f_g = jax.nn.sigmoid(gates[:, H:2 * H])
        g_g = jnp.tanh(gates[:, 2 * H:3 * H])
        o_g = jax.nn.sigmoid(gates[:, 3 * H:4 * H])
        c = f_g * c + i_g * g_g
        h = o_g * jnp.tanh(c)
    logits = h @ params["wfc"] + params["bfc"]
    return jax.nn.softmax(logits, axis=1)


def init_params(key, c_in, c_out=64, hidden=128, num_classes=2):
    """Deterministic synthetic parameters matching the module's shapes.
    conv_w[k] corresponds to conv1.weight[:, :, k].T ; b = b_ih + b_hh of the LSTM."""
    keys = jax.random.split(key, 7)
    s = 0.1
    return {
        "conv_w": s * jax.random.normal(keys[0], (3, c_in, c_out), jnp.float32),
        "conv_b": s * jax.random.normal(keys[1], (1, c_out), jnp.float32),
        "wih":    s * jax.random.normal(keys[2], (c_out, 4 * hidden), jnp.float32),
        "whh":    s * jax.random.normal(keys[3], (hidden, 4 * hidden), jnp.float32),
        "b":      s * jax.random.normal(keys[4], (1, 4 * hidden), jnp.float32),
        "wfc":    s * jax.random.normal(keys[5], (hidden, num_classes), jnp.float32),
        "bfc":    s * jax.random.normal(keys[6], (1, num_classes), jnp.float32),
    }


if __name__ == "__main__":
    # small shapes consistent with the module: batch=2, in_channels=16, seq_len=16, classes=2
    B, C_IN, L, NUM_CLASSES = 2, 16, 16, 2
    key = jax.random.PRNGKey(0)
    k_x, k_p = jax.random.split(key)
    x = jax.random.normal(k_x, (B, C_IN, L), jnp.float32)              # NCL, like PyTorch
    params = init_params(k_p, C_IN, c_out=64, hidden=128, num_classes=NUM_CLASSES)

    probs = jax.block_until_ready(cnn_lstm_forward(x, params))
    ref = jax.block_until_ready(cnn_lstm_reference(x, params))

    assert probs.shape == (B, NUM_CLASSES)
    assert bool(jnp.all(jnp.isfinite(probs)))
    # bf16 matmuls + approx reciprocal -> loose tolerance on probabilities
    assert float(jnp.max(jnp.abs(probs - ref))) < 5e-2
    print("KERNEL_OK")
</pallas_src>

<mosaic_0001>
module attributes {stable_mosaic.version = 11 : i64} {
  func.func @kernel(%arg0: i32, %arg1: memref<128x48xbf16, #tpu.memory_space<vmem>>, %arg2: memref<48x64xbf16, #tpu.memory_space<vmem>>, %arg3: memref<1x64xf32, #tpu.memory_space<vmem>>, %arg4: memref<64x512xbf16, #tpu.memory_space<vmem>>, %arg5: memref<128x512xbf16, #tpu.memory_space<vmem>>, %arg6: memref<1x512xf32, #tpu.memory_space<vmem>>, %arg7: memref<2x128xf32, #tpu.memory_space<vmem>>, %arg8: memref<1x2xf32, #tpu.memory_space<vmem>>, %arg9: memref<2x2xf32, #tpu.memory_space<vmem>>) attributes {dimension_semantics = [#tpu.dimension_semantics<arbitrary>], iteration_bounds = array<i64: 1>, scalar_prefetch = 0 : i64, scratch_operands = 0 : i64, tpu.core_type = #tpu.core_type<tc>, window_params = [{pipeline_mode = #tpu.pipeline_mode<synchronous>, transform_indices = @transform_0, window_bounds = array<i64: 128, 48>}, {pipeline_mode = #tpu.pipeline_mode<synchronous>, transform_indices = @transform_1, window_bounds = array<i64: 48, 64>}, {pipeline_mode = #tpu.pipeline_mode<synchronous>, transform_indices = @transform_2, window_bounds = array<i64: 1, 64>}, {pipeline_mode = #tpu.pipeline_mode<synchronous>, transform_indices = @transform_3, window_bounds = array<i64: 64, 512>}, {pipeline_mode = #tpu.pipeline_mode<synchronous>, transform_indices = @transform_4, window_bounds = array<i64: 128, 512>}, {pipeline_mode = #tpu.pipeline_mode<synchronous>, transform_indices = @transform_5, window_bounds = array<i64: 1, 512>}, {pipeline_mode = #tpu.pipeline_mode<synchronous>, transform_indices = @transform_6, window_bounds = array<i64: 2, 128>}, {pipeline_mode = #tpu.pipeline_mode<synchronous>, transform_indices = @transform_7, window_bounds = array<i64: 1, 2>}, {pipeline_mode = #tpu.pipeline_mode<synchronous>, transform_indices = @transform_8, window_bounds = array<i64: 2, 2>}]} {
    %c0 = arith.constant 0 : index
    %c0_0 = arith.constant 0 : index
    %0 = vector.load %arg1[%c0, %c0_0] : memref<128x48xbf16, #tpu.memory_space<vmem>>, vector<128x48xbf16>
    %c0_1 = arith.constant 0 : index
    %c0_2 = arith.constant 0 : index
    %1 = vector.load %arg2[%c0_1, %c0_2] : memref<48x64xbf16, #tpu.memory_space<vmem>>, vector<48x64xbf16>
    %cst = arith.constant dense<0.000000e+00> : vector<128x64xf32>
    %2 = tpu.matmul %0, %1, %cst {dimension_numbers = #tpu.dot_dimension_numbers<[1], [0], [0], [1], [0, 0, 1, 1], [], []>} : vector<128x48xbf16>, vector<48x64xbf16>, vector<128x64xf32> -> vector<128x64xf32>
    %c0_3 = arith.constant 0 : index
    %c0_4 = arith.constant 0 : index
    %3 = vector.load %arg3[%c0_3, %c0_4] : memref<1x64xf32, #tpu.memory_space<vmem>>, vector<1x64xf32>
    %4 = vector.broadcast %3 : vector<1x64xf32> to vector<128x64xf32>
    %5 = arith.addf %2, %4 : vector<128x64xf32>
    %cst_5 = arith.constant 0.000000e+00 : f32
    %6 = vector.broadcast %cst_5 : f32 to vector<128x64xf32>
    %7 = arith.maximumf %5, %6 : vector<128x64xf32>
    %8 = vector.shape_cast %7 : vector<128x64xf32> to vector<8x16x64xf32>
    %9 = vector.extract_strided_slice %8 {offsets = [0, 0, 0], sizes = [8, 8, 64], strides = [1, 1, 1]} : vector<8x16x64xf32> to vector<8x8x64xf32>
    %10 = vector.extract_strided_slice %8 {offsets = [0, 8, 0], sizes = [8, 8, 64], strides = [1, 1, 1]} : vector<8x16x64xf32> to vector<8x8x64xf32>
    %11 = arith.maximumf %9, %10 : vector<8x8x64xf32>
    %12 = vector.shape_cast %11 : vector<8x8x64xf32> to vector<64x64xf32>
    %13 = arith.truncf %12 : vector<64x64xf32> to vector<64x64xbf16>
    %c0_6 = arith.constant 0 : index
    %c0_7 = arith.constant 0 : index
    %14 = vector.load %arg4[%c0_6, %c0_7] : memref<64x512xbf16, #tpu.memory_space<vmem>>, vector<64x512xbf16>
    %cst_8 = arith.constant dense<0.000000e+00> : vector<64x512xf32>
    %15 = tpu.matmul %13, %14, %cst_8 {dimension_numbers = #tpu.dot_dimension_numbers<[1], [0], [0], [1], [0, 0, 1, 1], [], []>} : vector<64x64xbf16>, vector<64x512xbf16>, vector<64x512xf32> -> vector<64x512xf32>
    %c0_9 = arith.constant 0 : index
    %c0_10 = arith.constant 0 : index
    %16 = vector.load %arg6[%c0_9, %c0_10] : memref<1x512xf32, #tpu.memory_space<vmem>>, vector<1x512xf32>
    %17 = vector.broadcast %16 : vector<1x512xf32> to vector<64x512xf32>
    %18 = arith.addf %15, %17 : vector<64x512xf32>
    %19 = vector.shape_cast %18 : vector<64x512xf32> to vector<8x8x512xf32>
    %c0_11 = arith.constant 0 : index
    %c0_12 = arith.constant 0 : index
    %20 = vector.load %arg5[%c0_11, %c0_12] : memref<128x512xbf16, #tpu.memory_space<vmem>>, vector<128x512xbf16>
    %cst_13 = arith.constant 0.000000e+00 : f32
    %21 = vector.broadcast %cst_13 : f32 to vector<8x128xf32>
    %cst_14 = arith.constant 0.000000e+00 : f32
    %22 = vector.broadcast %cst_14 : f32 to vector<8x128xf32>
    %23 = vector.extract_strided_slice %19 {offsets = [0, 0, 0], sizes = [1, 8, 512], strides = [1, 1, 1]} : vector<8x8x512xf32> to vector<1x8x512xf32>
    %24 = vector.shape_cast %23 : vector<1x8x512xf32> to vector<8x512xf32>
    %25 = arith.truncf %21 : vector<8x128xf32> to vector<8x128xbf16>
    %cst_15 = arith.constant dense<0.000000e+00> : vector<8x512xf32>
    %26 = tpu.matmul %25, %20, %cst_15 {dimension_numbers = #tpu.dot_dimension_numbers<[1], [0], [0], [1], [0, 0, 1, 1], [], []>} : vector<8x128xbf16>, vector<128x512xbf16>, vector<8x512xf32> -> vector<8x512xf32>
    %27 = arith.addf %24, %26 : vector<8x512xf32>
    %28 = vector.extract_strided_slice %27 {offsets = [0, 0], sizes = [8, 384], strides = [1, 1]} : vector<8x512xf32> to vector<8x384xf32>
    %29 = arith.negf %28 : vector<8x384xf32>
    %30 = math.exp %29 : vector<8x384xf32>
    %cst_16 = arith.constant 1.000000e+00 : f32
    %31 = vector.broadcast %cst_16 : f32 to vector<8x384xf32>
    %32 = arith.addf %31, %30 : vector<8x384xf32>
    %33 = arith.divf %31, %32 : vector<8x384xf32>
    %34 = vector.extract_strided_slice %33 {offsets = [0, 0], sizes = [8, 128], strides = [1, 1]} : vector<8x384xf32> to vector<8x128xf32>
    %35 = vector.extract_strided_slice %33 {offsets = [0, 128], sizes = [8, 128], strides = [1, 1]} : vector<8x384xf32> to vector<8x128xf32>
    %36 = vector.extract_strided_slice %33 {offsets = [0, 256], sizes = [8, 128], strides = [1, 1]} : vector<8x384xf32> to vector<8x128xf32>
    %37 = vector.extract_strided_slice %27 {offsets = [0, 384], sizes = [8, 128], strides = [1, 1]} : vector<8x512xf32> to vector<8x128xf32>
    %38 = math.tanh %37 : vector<8x128xf32>
    %39 = arith.mulf %35, %22 : vector<8x128xf32>
    %40 = arith.mulf %34, %38 : vector<8x128xf32>
    %41 = arith.addf %39, %40 : vector<8x128xf32>
    %42 = math.tanh %41 : vector<8x128xf32>
    %43 = arith.mulf %36, %42 : vector<8x128xf32>
    %44 = vector.extract_strided_slice %19 {offsets = [1, 0, 0], sizes = [1, 8, 512], strides = [1, 1, 1]} : vector<8x8x512xf32> to vector<1x8x512xf32>
    %45 = vector.shape_cast %44 : vector<1x8x512xf32> to vector<8x512xf32>
    %46 = arith.truncf %43 : vector<8x128xf32> to vector<8x128xbf16>
    %cst_17 = arith.constant dense<0.000000e+00> : vector<8x512xf32>
    %47 = tpu.matmul %46, %20, %cst_17 {dimension_numbers = #tpu.dot_dimension_numbers<[1], [0], [0], [1], [0, 0, 1, 1], [], []>} : vector<8x128xbf16>, vector<128x512xbf16>, vector<8x512xf32> -> vector<8x512xf32>
    %48 = arith.addf %45, %47 : vector<8x512xf32>
    %49 = vector.extract_strided_slice %48 {offsets = [0, 0], sizes = [8, 384], strides = [1, 1]} : vector<8x512xf32> to vector<8x384xf32>
    %50 = arith.negf %49 : vector<8x384xf32>
    %51 = math.exp %50 : vector<8x384xf32>
    %cst_18 = arith.constant 1.000000e+00 : f32
    %52 = vector.broadcast %cst_18 : f32 to vector<8x384xf32>
    %53 = arith.addf %52, %51 : vector<8x384xf32>
    %54 = arith.divf %52, %53 : vector<8x384xf32>
    %55 = vector.extract_strided_slice %54 {offsets = [0, 0], sizes = [8, 128], strides = [1, 1]} : vector<8x384xf32> to vector<8x128xf32>
    %56 = vector.extract_strided_slice %54 {offsets = [0, 128], sizes = [8, 128], strides = [1, 1]} : vector<8x384xf32> to vector<8x128xf32>
    %57 = vector.extract_strided_slice %54 {offsets = [0, 256], sizes = [8, 128], strides = [1, 1]} : vector<8x384xf32> to vector<8x128xf32>
    %58 = vector.extract_strided_slice %48 {offsets = [0, 384], sizes = [8, 128], strides = [1, 1]} : vector<8x512xf32> to vector<8x128xf32>
    %59 = math.tanh %58 : vector<8x128xf32>
    %60 = arith.mulf %56, %41 : vector<8x128xf32>
    %61 = arith.mulf %55, %59 : vector<8x128xf32>
    %62 = arith.addf %60, %61 : vector<8x128xf32>
    %63 = math.tanh %62 : vector<8x128xf32>
    %64 = arith.mulf %57, %63 : vector<8x128xf32>
    %65 = vector.extract_strided_slice %19 {offsets = [2, 0, 0], sizes = [1, 8, 512], strides = [1, 1, 1]} : vector<8x8x512xf32> to vector<1x8x512xf32>
    %66 = vector.shape_cast %65 : vector<1x8x512xf32> to vector<8x512xf32>
    %67 = arith.truncf %64 : vector<8x128xf32> to vector<8x128xbf16>
    %cst_19 = arith.constant dense<0.000000e+00> : vector<8x512xf32>
    %68 = tpu.matmul %67, %20, %cst_19 {dimension_numbers = #tpu.dot_dimension_numbers<[1], [0], [0], [1], [0, 0, 1, 1], [], []>} : vector<8x128xbf16>, vector<128x512xbf16>, vector<8x512xf32> -> vector<8x512xf32>
    %69 = arith.addf %66, %68 : vector<8x512xf32>
    %70 = vector.extract_strided_slice %69 {offsets = [0, 0], sizes = [8, 384], strides = [1, 1]} : vector<8x512xf32> to vector<8x384xf32>
    %71 = arith.negf %70 : vector<8x384xf32>
    %72 = math.exp %71 : vector<8x384xf32>
    %cst_20 = arith.constant 1.000000e+00 : f32
    %73 = vector.broadcast %cst_20 : f32 to vector<8x384xf32>
    %74 = arith.addf %73, %72 : vector<8x384xf32>
    %75 = arith.divf %73, %74 : vector<8x384xf32>
    %76 = vector.extract_strided_slice %75 {offsets = [0, 0], sizes = [8, 128], strides = [1, 1]} : vector<8x384xf32> to vector<8x128xf32>
    %77 = vector.extract_strided_slice %75 {offsets = [0, 128], sizes = [8, 128], strides = [1, 1]} : vector<8x384xf32> to vector<8x128xf32>
    %78 = vector.extract_strided_slice %75 {offsets = [0, 256], sizes = [8, 128], strides = [1, 1]} : vector<8x384xf32> to vector<8x128xf32>
    %79 = vector.extract_strided_slice %69 {offsets = [0, 384], sizes = [8, 128], strides = [1, 1]} : vector<8x512xf32> to vector<8x128xf32>
    %80 = math.tanh %79 : vector<8x128xf32>
    %81 = arith.mulf %77, %62 : vector<8x128xf32>
    %82 = arith.mulf %76, %80 : vector<8x128xf32>
    %83 = arith.addf %81, %82 : vector<8x128xf32>
    %84 = math.tanh %83 : vector<8x128xf32>
    %85 = arith.mulf %78, %84 : vector<8x128xf32>
    %86 = vector.extract_strided_slice %19 {offsets = [3, 0, 0], sizes = [1, 8, 512], strides = [1, 1, 1]} : vector<8x8x512xf32> to vector<1x8x512xf32>
    %87 = vector.shape_cast %86 : vector<1x8x512xf32> to vector<8x512xf32>
    %88 = arith.truncf %85 : vector<8x128xf32> to vector<8x128xbf16>
    %cst_21 = arith.constant dense<0.000000e+00> : vector<8x512xf32>
    %89 = tpu.matmul %88, %20, %cst_21 {dimension_numbers = #tpu.dot_dimension_numbers<[1], [0], [0], [1], [0, 0, 1, 1], [], []>} : vector<8x128xbf16>, vector<128x512xbf16>, vector<8x512xf32> -> vector<8x512xf32>
    %90 = arith.addf %87, %89 : vector<8x512xf32>
    %91 = vector.extract_strided_slice %90 {offsets = [0, 0], sizes = [8, 384], strides = [1, 1]} : vector<8x512xf32> to vector<8x384xf32>
    %92 = arith.negf %91 : vector<8x384xf32>
    %93 = math.exp %92 : vector<8x384xf32>
    %cst_22 = arith.constant 1.000000e+00 : f32
    %94 = vector.broadcast %cst_22 : f32 to vector<8x384xf32>
    %95 = arith.addf %94, %93 : vector<8x384xf32>
    %96 = arith.divf %94, %95 : vector<8x384xf32>
    %97 = vector.extract_strided_slice %96 {offsets = [0, 0], sizes = [8, 128], strides = [1, 1]} : vector<8x384xf32> to vector<8x128xf32>
    %98 = vector.extract_strided_slice %96 {offsets = [0, 128], sizes = [8, 128], strides = [1, 1]} : vector<8x384xf32> to vector<8x128xf32>
    %99 = vector.extract_strided_slice %96 {offsets = [0, 256], sizes = [8, 128], strides = [1, 1]} : vector<8x384xf32> to vector<8x128xf32>
    %100 = vector.extract_strided_slice %90 {offsets = [0, 384], sizes = [8, 128], strides = [1, 1]} : vector<8x512xf32> to vector<8x128xf32>
    %101 = math.tanh %100 : vector<8x128xf32>
    %102 = arith.mulf %98, %83 : vector<8x128xf32>
    %103 = arith.mulf %97, %101 : vector<8x128xf32>
    %104 = arith.addf %102, %103 : vector<8x128xf32>
    %105 = math.tanh %104 : vector<8x128xf32>
    %106 = arith.mulf %99, %105 : vector<8x128xf32>
    %107 = vector.extract_strided_slice %19 {offsets = [4, 0, 0], sizes = [1, 8, 512], strides = [1, 1, 1]} : vector<8x8x512xf32> to vector<1x8x512xf32>
    %108 = vector.shape_cast %107 : vector<1x8x512xf32> to vector<8x512xf32>
    %109 = arith.truncf %106 : vector<8x128xf32> to vector<8x128xbf16>
    %cst_23 = arith.constant dense<0.000000e+00> : vector<8x512xf32>
    %110 = tpu.matmul %109, %20, %cst_23 {dimension_numbers = #tpu.dot_dimension_numbers<[1], [0], [0], [1], [0, 0, 1, 1], [], []>} : vector<8x128xbf16>, vector<128x512xbf16>, vector<8x512xf32> -> vector<8x512xf32>
    %111 = arith.addf %108, %110 : vector<8x512xf32>
    %112 = vector.extract_strided_slice %111 {offsets = [0, 0], sizes = [8, 384], strides = [1, 1]} : vector<8x512xf32> to vector<8x384xf32>
    %113 = arith.negf %112 : vector<8x384xf32>
    %114 = math.exp %113 : vector<8x384xf32>
    %cst_24 = arith.constant 1.000000e+00 : f32
    %115 = vector.broadcast %cst_24 : f32 to vector<8x384xf32>
    %116 = arith.addf %115, %114 : vector<8x384xf32>
    %117 = arith.divf %115, %116 : vector<8x384xf32>
    %118 = vector.extract_strided_slice %117 {offsets = [0, 0], sizes = [8, 128], strides = [1, 1]} : vector<8x384xf32> to vector<8x128xf32>
    %119 = vector.extract_strided_slice %117 {offsets = [0, 128], sizes = [8, 128], strides = [1, 1]} : vector<8x384xf32> to vector<8x128xf32>
    %120 = vector.extract_strided_slice %117 {offsets = [0, 256], sizes = [8, 128], strides = [1, 1]} : vector<8x384xf32> to vector<8x128xf32>
    %121 = vector.extract_strided_slice %111 {offsets = [0, 384], sizes = [8, 128], strides = [1, 1]} : vector<8x512xf32> to vector<8x128xf32>
    %122 = math.tanh %121 : vector<8x128xf32>
    %123 = arith.mulf %119, %104 : vector<8x128xf32>
    %124 = arith.mulf %118, %122 : vector<8x128xf32>
    %125 = arith.addf %123, %124 : vector<8x128xf32>
    %126 = math.tanh %125 : vector<8x128xf32>
    %127 = arith.mulf %120, %126 : vector<8x128xf32>
    %128 = vector.extract_strided_slice %19 {offsets = [5, 0, 0], sizes = [1, 8, 512], strides = [1, 1, 1]} : vector<8x8x512xf32> to vector<1x8x512xf32>
    %129 = vector.shape_cast %128 : vector<1x8x512xf32> to vector<8x512xf32>
    %130 = arith.truncf %127 : vector<8x128xf32> to vector<8x128xbf16>
    %cst_25 = arith.constant dense<0.000000e+00> : vector<8x512xf32>
    %131 = tpu.matmul %130, %20, %cst_25 {dimension_numbers = #tpu.dot_dimension_numbers<[1], [0], [0], [1], [0, 0, 1, 1], [], []>} : vector<8x128xbf16>, vector<128x512xbf16>, vector<8x512xf32> -> vector<8x512xf32>
    %132 = arith.addf %129, %131 : vector<8x512xf32>
    %133 = vector.extract_strided_slice %132 {offsets = [0, 0], sizes = [8, 384], strides = [1, 1]} : vector<8x512xf32> to vector<8x384xf32>
    %134 = arith.negf %133 : vector<8x384xf32>
    %135 = math.exp %134 : vector<8x384xf32>
    %cst_26 = arith.constant 1.000000e+00 : f32
    %136 = vector.broadcast %cst_26 : f32 to vector<8x384xf32>
    %137 = arith.addf %136, %135 : vector<8x384xf32>
    %138 = arith.divf %136, %137 : vector<8x384xf32>
    %139 = vector.extract_strided_slice %138 {offsets = [0, 0], sizes = [8, 128], strides = [1, 1]} : vector<8x384xf32> to vector<8x128xf32>
    %140 = vector.extract_strided_slice %138 {offsets = [0, 128], sizes = [8, 128], strides = [1, 1]} : vector<8x384xf32> to vector<8x128xf32>
    %141 = vector.extract_strided_slice %138 {offsets = [0, 256], sizes = [8, 128], strides = [1, 1]} : vector<8x384xf32> to vector<8x128xf32>
    %142 = vector.extract_strided_slice %132 {offsets = [0, 384], sizes = [8, 128], strides = [1, 1]} : vector<8x512xf32> to vector<8x128xf32>
    %143 = math.tanh %142 : vector<8x128xf32>
    %144 = arith.mulf %140, %125 : vector<8x128xf32>
    %145 = arith.mulf %139, %143 : vector<8x128xf32>
    %146 = arith.addf %144, %145 : vector<8x128xf32>
    %147 = math.tanh %146 : vector<8x128xf32>
    %148 = arith.mulf %141, %147 : vector<8x128xf32>
    %149 = vector.extract_strided_slice %19 {offsets = [6, 0, 0], sizes = [1, 8, 512], strides = [1, 1, 1]} : vector<8x8x512xf32> to vector<1x8x512xf32>
    %150 = vector.shape_cast %149 : vector<1x8x512xf32> to vector<8x512xf32>
    %151 = arith.truncf %148 : vector<8x128xf32> to vector<8x128xbf16>
    %cst_27 = arith.constant dense<0.000000e+00> : vector<8x512xf32>
    %152 = tpu.matmul %151, %20, %cst_27 {dimension_numbers = #tpu.dot_dimension_numbers<[1], [0], [0], [1], [0, 0, 1, 1], [], []>} : vector<8x128xbf16>, vector<128x512xbf16>, vector<8x512xf32> -> vector<8x512xf32>
    %153 = arith.addf %150, %152 : vector<8x512xf32>
    %154 = vector.extract_strided_slice %153 {offsets = [0, 0], sizes = [8, 384], strides = [1, 1]} : vector<8x512xf32> to vector<8x384xf32>
    %155 = arith.negf %154 : vector<8x384xf32>
    %156 = math.exp %155 : vector<8x384xf32>
    %cst_28 = arith.constant 1.000000e+00 : f32
    %157 = vector.broadcast %cst_28 : f32 to vector<8x384xf32>
    %158 = arith.addf %157, %156 : vector<8x384xf32>
    %159 = arith.divf %157, %158 : vector<8x384xf32>
    %160 = vector.extract_strided_slice %159 {offsets = [0, 0], sizes = [8, 128], strides = [1, 1]} : vector<8x384xf32> to vector<8x128xf32>
    %161 = vector.extract_strided_slice %159 {offsets = [0, 128], sizes = [8, 128], strides = [1, 1]} : vector<8x384xf32> to vector<8x128xf32>
    %162 = vector.extract_strided_slice %159 {offsets = [0, 256], sizes = [8, 128], strides = [1, 1]} : vector<8x384xf32> to vector<8x128xf32>
    %163 = vector.extract_strided_slice %153 {offsets = [0, 384], sizes = [8, 128], strides = [1, 1]} : vector<8x512xf32> to vector<8x128xf32>
    %164 = math.tanh %163 : vector<8x128xf32>
    %165 = arith.mulf %161, %146 : vector<8x128xf32>
    %166 = arith.mulf %160, %164 : vector<8x128xf32>
    %167 = arith.addf %165, %166 : vector<8x128xf32>
    %168 = math.tanh %167 : vector<8x128xf32>
    %169 = arith.mulf %162, %168 : vector<8x128xf32>
    %170 = vector.extract_strided_slice %19 {offsets = [7, 0, 0], sizes = [1, 8, 512], strides = [1, 1, 1]} : vector<8x8x512xf32> to vector<1x8x512xf32>
    %171 = vector.shape_cast %170 : vector<1x8x512xf32> to vector<8x512xf32>
    %172 = arith.truncf %169 : vector<8x128xf32> to vector<8x128xbf16>
    %cst_29 = arith.constant dense<0.000000e+00> : vector<8x512xf32>
    %173 = tpu.matmul %172, %20, %cst_29 {dimension_numbers = #tpu.dot_dimension_numbers<[1], [0], [0], [1], [0, 0, 1, 1], [], []>} : vector<8x128xbf16>, vector<128x512xbf16>, vector<8x512xf32> -> vector<8x512xf32>
    %174 = arith.addf %171, %173 : vector<8x512xf32>
    %175 = vector.extract_strided_slice %174 {offsets = [0, 0], sizes = [8, 384], strides = [1, 1]} : vector<8x512xf32> to vector<8x384xf32>
    %176 = arith.negf %175 : vector<8x384xf32>
    %177 = math.exp %176 : vector<8x384xf32>
    %cst_30 = arith.constant 1.000000e+00 : f32
    %178 = vector.broadcast %cst_30 : f32 to vector<8x384xf32>
    %179 = arith.addf %178, %177 : vector<8x384xf32>
    %180 = arith.divf %178, %179 : vector<8x384xf32>
    %181 = vector.extract_strided_slice %180 {offsets = [0, 0], sizes = [8, 128], strides = [1, 1]} : vector<8x384xf32> to vector<8x128xf32>
    %182 = vector.extract_strided_slice %180 {offsets = [0, 128], sizes = [8, 128], strides = [1, 1]} : vector<8x384xf32> to vector<8x128xf32>
    %183 = vector.extract_strided_slice %180 {offsets = [0, 256], sizes = [8, 128], strides = [1, 1]} : vector<8x384xf32> to vector<8x128xf32>
    %184 = vector.extract_strided_slice %174 {offsets = [0, 384], sizes = [8, 128], strides = [1, 1]} : vector<8x512xf32> to vector<8x128xf32>
    %185 = math.tanh %184 : vector<8x128xf32>
    %186 = arith.mulf %182, %167 : vector<8x128xf32>
    %187 = arith.mulf %181, %185 : vector<8x128xf32>
    %188 = arith.addf %186, %187 : vector<8x128xf32>
    %189 = math.tanh %188 : vector<8x128xf32>
    %190 = arith.mulf %183, %189 : vector<8x128xf32>
    %c0_31 = arith.constant 0 : index
    %c0_32 = arith.constant 0 : index
    %191 = vector.load %arg7[%c0_31, %c0_32] : memref<2x128xf32, #tpu.memory_space<vmem>>, vector<2x128xf32>
    %192 = vector.extract_strided_slice %191 {offsets = [0, 0], sizes = [1, 128], strides = [1, 1]} : vector<2x128xf32> to vector<1x128xf32>
    %193 = vector.broadcast %192 : vector<1x128xf32> to vector<8x128xf32>
    %194 = arith.mulf %190, %193 : vector<8x128xf32>
    %cst_33 = arith.constant dense<0.000000e+00> : vector<8xf32>
    %195 = vector.multi_reduction <add>, %194, %cst_33 [1] : vector<8x128xf32> to vector<8xf32>
    %196 = vector.shape_cast %195 : vector<8xf32> to vector<8x1xf32>
    %197 = vector.extract_strided_slice %191 {offsets = [1, 0], sizes = [1, 128], strides = [1, 1]} : vector<2x128xf32> to vector<1x128xf32>
    %198 = vector.broadcast %197 : vector<1x128xf32> to vector<8x128xf32>
    %199 = arith.mulf %190, %198 : vector<8x128xf32>
    %cst_34 = arith.constant dense<0.000000e+00> : vector<8xf32>
    %200 = vector.multi_reduction <add>, %199, %cst_34 [1] : vector<8x128xf32> to vector<8xf32>
    %201 = vector.shape_cast %200 : vector<8xf32> to vector<8x1xf32>
    %202 = tpu.concatenate %196, %201 in 1 : vector<8x1xf32>, vector<8x1xf32> -> vector<8x2xf32>
    %c0_35 = arith.constant 0 : index
    %c0_36 = arith.constant 0 : index
    %203 = vector.load %arg8[%c0_35, %c0_36] : memref<1x2xf32, #tpu.memory_space<vmem>>, vector<1x2xf32>
    %204 = vector.broadcast %203 : vector<1x2xf32> to vector<8x2xf32>
    %205 = arith.addf %202, %204 : vector<8x2xf32>
    %cst_37 = arith.constant dense<0xFF800000> : vector<8xf32>
    %206 = vector.multi_reduction <maximumf>, %205, %cst_37 [1] : vector<8x2xf32> to vector<8xf32>
    %207 = vector.shape_cast %206 : vector<8xf32> to vector<8x1xf32>
    %208 = vector.broadcast %207 : vector<8x1xf32> to vector<8x2xf32>
    %209 = arith.subf %205, %208 : vector<8x2xf32>
    %210 = math.exp %209 : vector<8x2xf32>
    %cst_38 = arith.constant dense<0.000000e+00> : vector<8xf32>
    %211 = vector.multi_reduction <add>, %210, %cst_38 [1] : vector<8x2xf32> to vector<8xf32>
    %212 = vector.shape_cast %211 : vector<8xf32> to vector<8x1xf32>
    %213 = tpu.reciprocal %212 {approx = true} : vector<8x1xf32> -> vector<8x1xf32>
    %214 = vector.broadcast %213 : vector<8x1xf32> to vector<8x2xf32>
    %215 = arith.mulf %210, %214 : vector<8x2xf32>
    %216 = vector.extract_strided_slice %215 {offsets = [0, 0], sizes = [2, 2], strides = [1, 1]} : vector<8x2xf32> to vector<2x2xf32>
    %c0_39 = arith.constant 0 : index
    %c0_40 = arith.constant 0 : index
    %217 = vector.load %arg9[%c0_39, %c0_40] : memref<2x2xf32, #tpu.memory_space<vmem>>, vector<2x2xf32>
    tpu.vector_store %arg9[%c0_39, %c0_40], %216 {strides = array<i32>} : memref<2x2xf32, #tpu.memory_space<vmem>>, vector<2x2xf32>,
    return
  }
  func.func @transform_0(%arg0: i32) -> (i32, i32) {
    %c0_i32 = arith.constant 0 : i32
    %c0_i32_0 = arith.constant 0 : i32
    %c0_i32_1 = arith.constant 0 : i32
    return %c0_i32, %c0_i32_0 : i32, i32
  }
  func.func @transform_1(%arg0: i32) -> (i32, i32) {
    %c0_i32 = arith.constant 0 : i32
    %c0_i32_0 = arith.constant 0 : i32
    %c0_i32_1 = arith.constant 0 : i32
    return %c0_i32, %c0_i32_0 : i32, i32
  }
  func.func @transform_2(%arg0: i32) -> (i32, i32) {
    %c0_i32 = arith.constant 0 : i32
    %c0_i32_0 = arith.constant 0 : i32
    %c0_i32_1 = arith.constant 0 : i32
    return %c0_i32, %c0_i32_0 : i32, i32
  }
  func.func @transform_3(%arg0: i32) -> (i32, i32) {
    %c0_i32 = arith.constant 0 : i32
    %c0_i32_0 = arith.constant 0 : i32
    %c0_i32_1 = arith.constant 0 : i32
    return %c0_i32, %c0_i32_0 : i32, i32
  }
  func.func @transform_4(%arg0: i32) -> (i32, i32) {
    %c0_i32 = arith.constant 0 : i32
    %c0_i32_0 = arith.constant 0 : i32
    %c0_i32_1 = arith.constant 0 : i32
    return %c0_i32, %c0_i32_0 : i32, i32
  }
  func.func @transform_5(%arg0: i32) -> (i32, i32) {
    %c0_i32 = arith.constant 0 : i32
    %c0_i32_0 = arith.constant 0 : i32
    %c0_i32_1 = arith.constant 0 : i32
    return %c0_i32, %c0_i32_0 : i32, i32
  }
  func.func @transform_6(%arg0: i32) -> (i32, i32) {
    %c0_i32 = arith.constant 0 : i32
    %c0_i32_0 = arith.constant 0 : i32
    %c0_i32_1 = arith.constant 0 : i32
    return %c0_i32, %c0_i32_0 : i32, i32
  }
  func.func @transform_7(%arg0: i32) -> (i32, i32) {
    %c0_i32 = arith.constant 0 : i32
    %c0_i32_0 = arith.constant 0 : i32
    %c0_i32_1 = arith.constant 0 : i32
    return %c0_i32, %c0_i32_0 : i32, i32
  }
  func.func @transform_8(%arg0: i32) -> (i32, i32) {
    %c0_i32 = arith.constant 0 : i32
    %c0_i32_0 = arith.constant 0 : i32
    %c0_i32_1 = arith.constant 0 : i32
    return %c0_i32, %c0_i32_0 : i32, i32
  }
}

</mosaic_0001>

<llo_original>
// kernel: tpu_custom_call.1
$region0: #{tpu_custom_call.1}
  #allocation0 [shape = 'u32[]', space=smem, size = 0x4, offset = 0x4, fixed_abs, tag = 'smem constant byte address 0x4 - core index']
  #allocation1 [shape = 'u32[72,128]{1,0:T(1,128)}', space=vmem, size = 0x9000, scoped, tag = 'internal scratch']
  %s0 = inlined_call_operand.vmem [shape: bf16[128,48], index: 0, kind: input, shape index: {}]
  %s1 = inlined_call_operand.vmem [shape: bf16[48,64], index: 1, kind: input, shape index: {}]
  %s2 = inlined_call_operand.vmem [shape: f32[1,64], index: 2, kind: input, shape index: {}]
  %s3 = inlined_call_operand.hbm [shape: bf16[64,512], index: 3, kind: input, shape index: {}]
  %s4 = inlined_call_operand.hbm [shape: bf16[128,512], index: 4, kind: input, shape index: {}]
  %s5 = inlined_call_operand.vmem [shape: f32[1,512], index: 5, kind: input, shape index: {}]
  %s6 = inlined_call_operand.vmem [shape: f32[2,128], index: 6, kind: input, shape index: {}]
  %s7 = inlined_call_operand.vmem [shape: f32[1,2], index: 7, kind: input, shape index: {}]
  %s8 = inlined_call_operand.hbm [shape: f32[2,2], index: 8, kind: output, shape index: {}]
  %s9 = sld [smem:[#allocation0]]
  $region50: #{tpu_custom_call.1} parent=0
    _
  %s11 = ssub.s32 1, %s9
  %s12 = scalar_select 0, %s11, %s9
  $region1: #{tpu_custom_call.1} parent=0
    #allocation2 [shape = 'u8[65536]{0}', space=vmem, size = 0x10000, scoped, tag = 'input window, operand 3, single buffered']
    #allocation3 [shape = 's32[1]{0}', space=sflag, size = 0x4, scoped, tag = 'scoped memory for tpu_custom_call.1']
    #allocation4 [shape = 's32[1]{0}', space=sflag, size = 0x4, scoped, tag = 'scoped memory for tpu_custom_call.1']
    #allocation5 [shape = 'u8[131072]{0}', space=vmem, size = 0x20000, scoped, tag = 'input window, operand 4, single buffered']
    #allocation6 [shape = 's32[1]{0}', space=sflag, size = 0x4, scoped, tag = 'scoped memory for tpu_custom_call.1']
    #allocation7 [shape = 'u8[1024]{0}', space=vmem, size = 0x400, scoped, tag = 'output window, operand 0, single buffered']
    %13 = vsyncpa [#allocation3], 0
    %14 = vsyncpa [#allocation6], 0
    %15 = vsyncpa [#allocation4], 0
    // Predicated region
    $region2: #{tpu_custom_call.1} parent=1 // pred_check
      _
    $region3: #{tpu_custom_call.1} parent=1 // pred_check_branch
      %17 = sbr.rel (0) target = $region5
    $region4: #{tpu_custom_call.1} parent=1 // pred_region
      _
    $region5: #{tpu_custom_call.1} parent=1 // pred_fallthru
      _
    // Predicated region
    $region6: #{tpu_custom_call.1} parent=1 // pred_check
      _
    $region7: #{tpu_custom_call.1} parent=1 // pred_check_branch
      %19 = sbr.rel (0) target = $region9
    $region8: #{tpu_custom_call.1} parent=1 // pred_region
      _
    $region9: #{tpu_custom_call.1} parent=1 // pred_fallthru
      _
    // Predicated region
    $region10: #{tpu_custom_call.1} parent=1 // pred_check
      _
    $region11: #{tpu_custom_call.1} parent=1 // pred_check_branch
      %21 = sbr.rel (0) target = $region13
    $region12: #{tpu_custom_call.1} parent=1 // pred_region
      _
    $region13: #{tpu_custom_call.1} parent=1 // pred_fallthru
      _
    // Predicated region
    $region14: #{tpu_custom_call.1} parent=1 // pred_check
      _
    $region15: #{tpu_custom_call.1} parent=1 // pred_check_branch
      %23 = sbr.rel (0) target = $region17
    $region16: #{tpu_custom_call.1} parent=1 // pred_region
      %25 = vsyncadd [#allocation3], 0
      %s26 = sshll.u32 %s3, 4
      %s27 = int_to_ptr.hbm [resolvable:$true] %s26
      %s28 = sshll.u32 [#allocation2], 4
      %s29 = int_to_ptr.vmem [resolvable:$true] %s28
      %34 = dma.hbm_to_vmem [thread:$0]  %s27, 2048, %s29, [#allocation3], 256, 256, 16
    $region17: #{tpu_custom_call.1} parent=1 // pred_fallthru
      _
    // Predicated region
    $region18: #{tpu_custom_call.1} parent=1 // pred_check
      _
    $region19: #{tpu_custom_call.1} parent=1 // pred_check_branch
      %36 = sbr.rel (0) target = $region21
    $region20: #{tpu_custom_call.1} parent=1 // pred_region
      %38 = vsyncadd [#allocation6], 0
      %s39 = sshll.u32 %s4, 4
      %s40 = int_to_ptr.hbm [resolvable:$true] %s39
      %s41 = sshll.u32 [#allocation5], 4
      %s42 = int_to_ptr.vmem [resolvable:$true] %s41
      %47 = dma.hbm_to_vmem [thread:$0]  %s40, 4096, %s42, [#allocation6], 256, 256, 16
    $region21: #{tpu_custom_call.1} parent=1 // pred_fallthru
      _
    // Predicated region
    $region22: #{tpu_custom_call.1} parent=1 // pred_check
      _
    $region23: #{tpu_custom_call.1} parent=1 // pred_check_branch
      %49 = sbr.rel (0) target = $region25
    $region24: #{tpu_custom_call.1} parent=1 // pred_region
      _
    $region25: #{tpu_custom_call.1} parent=1 // pred_fallthru
      _
    // Predicated region
    $region26: #{tpu_custom_call.1} parent=1 // pred_check
      _
    $region27: #{tpu_custom_call.1} parent=1 // pred_check_branch
      %51 = sbr.rel (0) target = $region29
    $region28: #{tpu_custom_call.1} parent=1 // pred_region
      _
    $region29: #{tpu_custom_call.1} parent=1 // pred_fallthru
      _
    // Predicated region
    $region30: #{tpu_custom_call.1} parent=1 // pred_check
      _
    $region31: #{tpu_custom_call.1} parent=1 // pred_check_branch
      %53 = sbr.rel (0) target = $region33
    $region32: #{tpu_custom_call.1} parent=1 // pred_region
      _
    $region33: #{tpu_custom_call.1} parent=1 // pred_fallthru
      _
    // Predicated region
    $region34: #{tpu_custom_call.1} parent=1 // pred_check
      _
    $region35: #{tpu_custom_call.1} parent=1 // pred_check_branch
      %55 = sbr.rel (0) target = $region37
    $region36: #{tpu_custom_call.1} parent=1 // pred_region
      %57 = dma.done [#allocation3], 2048
    $region37: #{tpu_custom_call.1} parent=1 // pred_fallthru
      _
    // Predicated region
    $region38: #{tpu_custom_call.1} parent=1 // pred_check
      _
    $region39: #{tpu_custom_call.1} parent=1 // pred_check_branch
      %59 = sbr.rel (0) target = $region41
    $region40: #{tpu_custom_call.1} parent=1 // pred_region
      %61 = dma.done [#allocation6], 4096
    $region41: #{tpu_custom_call.1} parent=1 // pred_fallthru
      _
    %v63 = vld [vmem:[%s0] sm:$0xf]
    %v64 = vld [vmem:[%s0 + $0x4] sm:$0xf]
    %v65 = vld [vmem:[%s0 + $0x8] sm:$0xf]
    %v66 = vld [vmem:[%s0 + $0xc] sm:$0xf]
    %v67 = vld [vmem:[%s0 + $0x10] sm:$0xf]
    %v68 = vld [vmem:[%s0 + $0x14] sm:$0xf]
    %v69 = vld [vmem:[%s0 + $0x18] sm:$0xf]
    %v70 = vld [vmem:[%s0 + $0x1c] sm:$0xf]
    %v71 = vld [vmem:[%s0 + $0x20] sm:$0xf]
    %v72 = vld [vmem:[%s0 + $0x24] sm:$0xf]
    %v73 = vld [vmem:[%s0 + $0x28] sm:$0xf]
    %v74 = vld [vmem:[%s0 + $0x2c] sm:$0xf]
    %v75 = vld [vmem:[%s0 + $0x30] sm:$0xf]
    %v76 = vld [vmem:[%s0 + $0x34] sm:$0xf]
    %v77 = vld [vmem:[%s0 + $0x38] sm:$0xf]
    %v78 = vld [vmem:[%s0 + $0x3c] sm:$0xf]
    %v79 = vld [vmem:[%s1] sm:$0xf]
    %v80 = vld [vmem:[%s1 + $0x4] sm:$0xf]
    %v81 = vld [vmem:[%s1 + $0x8] sm:$0xf]
    %v82 = vld [vmem:[%s1 + $0xc] sm:$0xf]
    %v83 = vld [vmem:[%s1 + $0x10] sm:$0xf]
    %v84 = vld [vmem:[%s1 + $0x14] sm:$0xf]
    %v85 = vld [vmem:[%s2] sm:$0x1]
    %v87 = vperm.slane %v85, 0
    %v105 = vunpack.c.l.b16 %v63
    %v106 = vunpack.c.l.b16 %v64
    %v107 = vunpack.c.l.b16 %v65
    %v108 = vunpack.c.l.b16 %v66
    %v109 = vunpack.c.l.b16 %v67
    %v110 = vunpack.c.l.b16 %v68
    %v111 = vunpack.c.l.b16 %v69
    %v112 = vunpack.c.l.b16 %v70
    %v113 = vunpack.c.l.b16 %v71
    %v114 = vunpack.c.l.b16 %v72
    %v115 = vunpack.c.l.b16 %v73
    %v116 = vunpack.c.l.b16 %v74
    %v117 = vunpack.c.l.b16 %v75
    %v118 = vunpack.c.l.b16 %v76
    %v119 = vunpack.c.l.b16 %v77
    %v120 = vunpack.c.l.b16 %v78
    %v121 = vpack.c.b16 %v106, %v105
    %v122 = vpack.c.b16 %v108, %v107
    %v123 = vpack.c.b16 %v110, %v109
    %v124 = vpack.c.b16 %v112, %v111
    %v125 = vpack.c.b16 %v114, %v113
    %v126 = vpack.c.b16 %v116, %v115
    %v127 = vpack.c.b16 %v118, %v117
    %v128 = vpack.c.b16 %v120, %v119
    %v135 = vunpack.c.l.b16 %v79
    %v136 = vunpack.c.l.b16 %v80
    %v137 = vunpack.c.l.b16 %v81
    %v138 = vunpack.c.l.b16 %v82
    %v139 = vunpack.c.l.b16 %v83
    %v140 = vunpack.c.l.b16 %v84
    %v141 = vpack.c.b16 %v136, %v135
    %v142 = vpack.c.b16 %v138, %v137
    %v143 = vpack.c.b16 %v140, %v139
    %vm147 = vcmask 392192
    %v149 = vsel %vm147, %v121, 0
    %v152 = vsel %vm147, %v122, 0
    %v155 = vsel %vm147, %v123, 0
    %v158 = vsel %vm147, %v124, 0
    %v161 = vsel %vm147, %v125, 0
    %v164 = vsel %vm147, %v126, 0
    %v167 = vsel %vm147, %v127, 0
    %v170 = vsel %vm147, %v128, 0
    %172 = vmatpush.bf16.msra.mxu0 0
    %173 = vmatpush.bf16.msra.mxu0 0
    %174 = vmatpush.bf16.msra.mxu0 0
    %175 = vmatpush.bf16.msra.mxu0 0
    %176 = vmatpush.bf16.msra.mxu0 0
    %177 = vmatpush.bf16.msra.mxu0 %v143
    %178 = vmatpush.bf16.msra.mxu0 %v142
    %179 = vmatpush.bf16.msra.mxu0 %v141
    %180 = vmatmul.bf16.gmra.mxu0 %v149
    %v181 = vpop.f32.mrf.mxu0
    %v182 = vadd.f32 %v87, %v181
    %v183 = vpop.f32.mrf.mxu0
    %v184 = vadd.f32 %v87, %v183
    %185 = vmatmul.bf16.gmra.mxu0 %v152
    %v186 = vpop.f32.mrf.mxu0
    %v187 = vadd.f32 %v87, %v186
    %v188 = vpop.f32.mrf.mxu0
    %v189 = vadd.f32 %v87, %v188
    %190 = vmatmul.bf16.gmra.mxu0 %v155
    %v191 = vpop.f32.mrf.mxu0
    %v192 = vadd.f32 %v87, %v191
    %v193 = vpop.f32.mrf.mxu0
    %v194 = vadd.f32 %v87, %v193
    %195 = vmatmul.bf16.gmra.mxu0 %v158
    %v196 = vpop.f32.mrf.mxu0
    %v197 = vadd.f32 %v87, %v196
    %v198 = vpop.f32.mrf.mxu0
    %v199 = vadd.f32 %v87, %v198
    %200 = vmatmul.bf16.gmra.mxu0 %v161
    %v201 = vpop.f32.mrf.mxu0
    %v202 = vadd.f32 %v87, %v201
    %v203 = vpop.f32.mrf.mxu0
    %v204 = vadd.f32 %v87, %v203
    %205 = vmatmul.bf16.gmra.mxu0 %v164
    %v206 = vpop.f32.mrf.mxu0
    %v207 = vadd.f32 %v87, %v206
    %v208 = vpop.f32.mrf.mxu0
    %v209 = vadd.f32 %v87, %v208
    %210 = vmatmul.bf16.gmra.mxu0 %v167
    %v211 = vpop.f32.mrf.mxu0
    %v212 = vadd.f32 %v87, %v211
    %v213 = vpop.f32.mrf.mxu0
    %v214 = vadd.f32 %v87, %v213
    %215 = vmatmul.bf16.gmra.mxu0 %v170
    %v216 = vpop.f32.mrf.mxu0
    %v217 = vadd.f32 %v87, %v216
    %v218 = vpop.f32.mrf.mxu0
    %v219 = vadd.f32 %v87, %v218
    %220 = vdwg.mxu0
    %v221 = vmax.f32 %v182, 0.0
    %v222 = vmax.f32 %v184, 0.0
    %v223 = vmax.f32 %v187, 0.0
    %v224 = vmax.f32 %v189, 0.0
    %v225 = vmax.f32 %v192, 0.0
    %v226 = vmax.f32 %v194, 0.0
    %v227 = vmax.f32 %v197, 0.0
    %v228 = vmax.f32 %v199, 0.0
    %v229 = vmax.f32 %v202, 0.0
    %v230 = vmax.f32 %v204, 0.0
    %v231 = vmax.f32 %v207, 0.0
    %v232 = vmax.f32 %v209, 0.0
    %v233 = vmax.f32 %v212, 0.0
    %v234 = vmax.f32 %v214, 0.0
    %v235 = vmax.f32 %v217, 0.0
    %v236 = vmax.f32 %v219, 0.0
    %v237 = vmax.f32 %v221, %v222
    %v238 = vmax.f32 %v223, %v224
    %v239 = vmax.f32 %v225, %v226
    %v240 = vmax.f32 %v227, %v228
    %v241 = vmax.f32 %v229, %v230
    %v242 = vmax.f32 %v231, %v232
    %v243 = vmax.f32 %v233, %v234
    %v244 = vmax.f32 %v235, %v236
    %v245 = vpack.c.bf16 %v238, %v237
    %v246 = vpack.c.bf16 %v240, %v239
    %v247 = vpack.c.bf16 %v242, %v241
    %v248 = vpack.c.bf16 %v244, %v243
    %v249 = vld [vmem:[#allocation2] sm:$0xff]
    %v250 = vld [vmem:[#allocation2 + $0x8] sm:$0xff]
    %v251 = vld [vmem:[#allocation2 + $0x10] sm:$0xff]
    %v252 = vld [vmem:[#allocation2 + $0x18] sm:$0xff]
    %v253 = vld [vmem:[#allocation2 + $0x20] sm:$0xff]
    %v254 = vld [vmem:[#allocation2 + $0x28] sm:$0xff]
    %v255 = vld [vmem:[#allocation2 + $0x30] sm:$0xff]
    %v256 = vld [vmem:[#allocation2 + $0x38] sm:$0xff]
    %v257 = vld [vmem:[#allocation2 + $0x40] sm:$0xff]
    %v258 = vld [vmem:[#allocation2 + $0x48] sm:$0xff]
    %v259 = vld [vmem:[#allocation2 + $0x50] sm:$0xff]
    %v260 = vld [vmem:[#allocation2 + $0x58] sm:$0xff]
    %v261 = vld [vmem:[#allocation2 + $0x60] sm:$0xff]
    %v262 = vld [vmem:[#allocation2 + $0x68] sm:$0xff]
    %v263 = vld [vmem:[#allocation2 + $0x70] sm:$0xff]
    %v264 = vld [vmem:[#allocation2 + $0x78] sm:$0xff]
    %v265 = vld [vmem:[%s5] sm:$0xf]
    %v267 = vperm.slane %v265, 0
    %v268 = vperm.slane %v265, 1
    %v269 = vperm.slane %v265, 2
    %v270 = vperm.slane %v265, 3
    %v291 = vunpack.c.l.b16 %v249
    %v292 = vunpack.c.h.b16 %v249
    %v293 = vunpack.c.l.b16 %v250
    %v294 = vunpack.c.h.b16 %v250
    %v295 = vunpack.c.l.b16 %v251
    %v296 = vunpack.c.h.b16 %v251
    %v297 = vunpack.c.l.b16 %v252
    %v298 = vunpack.c.h.b16 %v252
    %v299 = vunpack.c.l.b16 %v253
    %v300 = vunpack.c.h.b16 %v253
    %v301 = vunpack.c.l.b16 %v254
    %v302 = vunpack.c.h.b16 %v254
    %v303 = vunpack.c.l.b16 %v255
    %v304 = vunpack.c.h.b16 %v255
    %v305 = vunpack.c.l.b16 %v256
    %v306 = vunpack.c.h.b16 %v256
    %v307 = vunpack.c.l.b16 %v257
    %v308 = vunpack.c.h.b16 %v257
    %v309 = vunpack.c.l.b16 %v258
    %v310 = vunpack.c.h.b16 %v258
    %v311 = vunpack.c.l.b16 %v259
    %v312 = vunpack.c.h.b16 %v259
    %v313 = vunpack.c.l.b16 %v260
    %v314 = vunpack.c.h.b16 %v260
    %v315 = vunpack.c.l.b16 %v261
    %v316 = vunpack.c.h.b16 %v261
    %v317 = vunpack.c.l.b16 %v262
    %v318 = vunpack.c.h.b16 %v262
    %v319 = vunpack.c.l.b16 %v263
    %v320 = vunpack.c.h.b16 %v263
    %v321 = vunpack.c.l.b16 %v264
    %v322 = vunpack.c.h.b16 %v264
    %v323 = vpack.c.b16 %v295, %v291
    %v324 = vpack.c.b16 %v296, %v292
    %v325 = vpack.c.b16 %v297, %v293
    %v326 = vpack.c.b16 %v298, %v294
    %v327 = vpack.c.b16 %v303, %v299
    %v328 = vpack.c.b16 %v304, %v300
    %v329 = vpack.c.b16 %v305, %v301
    %v330 = vpack.c.b16 %v306, %v302
    %v331 = vpack.c.b16 %v311, %v307
    %v332 = vpack.c.b16 %v312, %v308
    %v333 = vpack.c.b16 %v313, %v309
    %v334 = vpack.c.b16 %v314, %v310
    %v335 = vpack.c.b16 %v319, %v315
    %v336 = vpack.c.b16 %v320, %v316
    %v337 = vpack.c.b16 %v321, %v317
    %v338 = vpack.c.b16 %v322, %v318
    %vm355 = vcmask 523264
    %v357 = vsel %vm355, %v245, 0
    %v360 = vsel %vm355, %v246, 0
    %v363 = vsel %vm355, %v247, 0
    %v366 = vsel %vm355, %v248, 0
    %368 = vmatpush.bf16.msra.mxu0 0
    %369 = vmatpush.bf16.msra.mxu0 0
    %370 = vmatpush.bf16.msra.mxu0 0
    %371 = vmatpush.bf16.msra.mxu0 0
    %372 = vmatpush.bf16.msra.mxu0 %v335
    %373 = vmatpush.bf16.msra.mxu0 %v331
    %374 = vmatpush.bf16.msra.mxu0 %v327
    %375 = vmatpush.bf16.msra.mxu0 %v323
    %376 = vmatmul.bf16.gmra.mxu0 %v357
    %v377 = vpop.f32.mrf.mxu0
    %v378 = vadd.f32 %v267, %v377
    %v379 = vpop.f32.mrf.mxu0
    %v380 = vadd.f32 %v267, %v379
    %381 = vmatmul.bf16.gmra.mxu0 %v360
    %v382 = vpop.f32.mrf.mxu0
    %v383 = vadd.f32 %v267, %v382
    %v384 = vpop.f32.mrf.mxu0
    %v385 = vadd.f32 %v267, %v384
    %386 = vmatmul.bf16.gmra.mxu0 %v363
    %v387 = vpop.f32.mrf.mxu0
    %v388 = vadd.f32 %v267, %v387
    %v389 = vpop.f32.mrf.mxu0
    %v390 = vadd.f32 %v267, %v389
    %391 = vmatmul.bf16.gmra.mxu0 %v366
    %v392 = vpop.f32.mrf.mxu0
    %v393 = vadd.f32 %v267, %v392
    %v394 = vpop.f32.mrf.mxu0
    %v395 = vadd.f32 %v267, %v394
    %396 = vdwg.mxu0
    %397 = vmatpush.bf16.msra.mxu0 0
    %398 = vmatpush.bf16.msra.mxu0 0
    %399 = vmatpush.bf16.msra.mxu0 0
    %400 = vmatpush.bf16.msra.mxu0 0
    %401 = vmatpush.bf16.msra.mxu0 %v336
    %402 = vmatpush.bf16.msra.mxu0 %v332
    %403 = vmatpush.bf16.msra.mxu0 %v328
    %404 = vmatpush.bf16.msra.mxu0 %v324
    %405 = vmatmul.bf16.gmra.mxu0 %v357
    %v406 = vpop.f32.mrf.mxu0
    %v407 = vadd.f32 %v268, %v406
    %v408 = vpop.f32.mrf.mxu0
    %v409 = vadd.f32 %v268, %v408
    %410 = vmatmul.bf16.gmra.mxu0 %v360
    %v411 = vpop.f32.mrf.mxu0
    %v412 = vadd.f32 %v268, %v411
    %v413 = vpop.f32.mrf.mxu0
    %v414 = vadd.f32 %v268, %v413
    %415 = vmatmul.bf16.gmra.mxu0 %v363
    %v416 = vpop.f32.mrf.mxu0
    %v417 = vadd.f32 %v268, %v416
    %v418 = vpop.f32.mrf.mxu0
    %v419 = vadd.f32 %v268, %v418
    %420 = vmatmul.bf16.gmra.mxu0 %v366
    %v421 = vpop.f32.mrf.mxu0
    %v422 = vadd.f32 %v268, %v421
    %v423 = vpop.f32.mrf.mxu0
    %v424 = vadd.f32 %v268, %v423
    %425 = vdwg.mxu0
    %426 = vmatpush.bf16.msra.mxu0 0
    %427 = vmatpush.bf16.msra.mxu0 0
    %428 = vmatpush.bf16.msra.mxu0 0
    %429 = vmatpush.bf16.msra.mxu0 0
    %430 = vmatpush.bf16.msra.mxu0 %v337
    %431 = vmatpush.bf16.msra.mxu0 %v333
    %432 = vmatpush.bf16.msra.mxu0 %v329
    %433 = vmatpush.bf16.msra.mxu0 %v325
    %434 = vmatmul.bf16.gmra.mxu0 %v357
    %v435 = vpop.f32.mrf.mxu0
    %v436 = vadd.f32 %v269, %v435
    %v437 = vpop.f32.mrf.mxu0
    %v438 = vadd.f32 %v269, %v437
    %439 = vmatmul.bf16.gmra.mxu0 %v360
    %v440 = vpop.f32.mrf.mxu0
    %v441 = vadd.f32 %v269, %v440
    %v442 = vpop.f32.mrf.mxu0
    %v443 = vadd.f32 %v269, %v442
    %444 = vmatmul.bf16.gmra.mxu0 %v363
    %v445 = vpop.f32.mrf.mxu0
    %v446 = vadd.f32 %v269, %v445
    %v447 = vpop.f32.mrf.mxu0
    %v448 = vadd.f32 %v269, %v447
    %449 = vmatmul.bf16.gmra.mxu0 %v366
    %v450 = vpop.f32.mrf.mxu0
    %v451 = vadd.f32 %v269, %v450
    %v452 = vpop.f32.mrf.mxu0
    %v453 = vadd.f32 %v269, %v452
    %454 = vdwg.mxu0
    %455 = vmatpush.bf16.msra.mxu0 0
    %456 = vmatpush.bf16.msra.mxu0 0
    %457 = vmatpush.bf16.msra.mxu0 0
    %458 = vmatpush.bf16.msra.mxu0 0
    %459 = vmatpush.bf16.msra.mxu0 %v338
    %460 = vmatpush.bf16.msra.mxu0 %v334
    %461 = vmatpush.bf16.msra.mxu0 %v330
    %462 = vmatpush.bf16.msra.mxu0 %v326
    %463 = vmatmul.bf16.gmra.mxu0 %v357
    %v464 = vpop.f32.mrf.mxu0
    %v465 = vadd.f32 %v270, %v464
    %v466 = vpop.f32.mrf.mxu0
    %v467 = vadd.f32 %v270, %v466
    %468 = vmatmul.bf16.gmra.mxu0 %v360
    %v469 = vpop.f32.mrf.mxu0
    %v470 = vadd.f32 %v270, %v469
    %v471 = vpop.f32.mrf.mxu0
    %v472 = vadd.f32 %v270, %v471
    %473 = vmatmul.bf16.gmra.mxu0 %v363
    %v474 = vpop.f32.mrf.mxu0
    %v475 = vadd.f32 %v270, %v474
    %v476 = vpop.f32.mrf.mxu0
    %v477 = vadd.f32 %v270, %v476
    %478 = vmatmul.bf16.gmra.mxu0 %v366
    %v479 = vpop.f32.mrf.mxu0
    %v480 = vadd.f32 %v270, %v479
    %v481 = vpop.f32.mrf.mxu0
    %v482 = vadd.f32 %v270, %v481
    %483 = vdwg.mxu0
    %v484 = vld [vmem:[#allocation5] sm:$0xff]
    %v485 = vld [vmem:[#allocation5 + $0x8] sm:$0xff]
    %v486 = vld [vmem:[#allocation5 + $0x10] sm:$0xff]
    %v487 = vld [vmem:[#allocation5 + $0x18] sm:$0xff]
    %v488 = vld [vmem:[#allocation5 + $0x20] sm:$0xff]
    %v489 = vld [vmem:[#allocation5 + $0x28] sm:$0xff]
    %v490 = vld [vmem:[#allocation5 + $0x30] sm:$0xff]
    %v491 = vld [vmem:[#allocation5 + $0x38] sm:$0xff]
    %v492 = vld [vmem:[#allocation5 + $0x40] sm:$0xff]
    %v493 = vld [vmem:[#allocation5 + $0x48] sm:$0xff]
    %v494 = vld [vmem:[#allocation5 + $0x50] sm:$0xff]
    %v495 = vld [vmem:[#allocation5 + $0x58] sm:$0xff]
    %v496 = vld [vmem:[#allocation5 + $0x60] sm:$0xff]
    %v497 = vld [vmem:[#allocation5 + $0x68] sm:$0xff]
    %v498 = vld [vmem:[#allocation5 + $0x70] sm:$0xff]
    %v499 = vld [vmem:[#allocation5 + $0x78] sm:$0xff]
    %v500 = vld [vmem:[#allocation5 + $0x80] sm:$0xff]
    %v501 = vld [vmem:[#allocation5 + $0x88] sm:$0xff]
    %v502 = vld [vmem:[#allocation5 + $0x90] sm:$0xff]
    %v503 = vld [vmem:[#allocation5 + $0x98] sm:$0xff]
    %v504 = vld [vmem:[#allocation5 + $0xa0] sm:$0xff]
    %v505 = vld [vmem:[#allocation5 + $0xa8] sm:$0xff]
    %v506 = vld [vmem:[#allocation5 + $0xb0] sm:$0xff]
    %v507 = vld [vmem:[#allocation5 + $0xb8] sm:$0xff]
    %v508 = vld [vmem:[#allocation5 + $0xc0] sm:$0xff]
    %v509 = vld [vmem:[#allocation5 + $0xc8] sm:$0xff]
    %v510 = vld [vmem:[#allocation5 + $0xd0] sm:$0xff]
    %v511 = vld [vmem:[#allocation5 + $0xd8] sm:$0xff]
    %v512 = vld [vmem:[#allocation5 + $0xe0] sm:$0xff]
    %v513 = vld [vmem:[#allocation5 + $0xe8] sm:$0xff]
    %v514 = vld [vmem:[#allocation5 + $0xf0] sm:$0xff]
    %v515 = vld [vmem:[#allocation5 + $0xf8] sm:$0xff]
    %v548 = vunpack.c.l.b16 %v484
    %v549 = vunpack.c.h.b16 %v484
    %v550 = vunpack.c.l.b16 %v485
    %v551 = vunpack.c.h.b16 %v485
    %v552 = vunpack.c.l.b16 %v486
    %v553 = vunpack.c.h.b16 %v486
    %v554 = vunpack.c.l.b16 %v487
    %v555 = vunpack.c.h.b16 %v487
    %v556 = vunpack.c.l.b16 %v488
    %v557 = vunpack.c.h.b16 %v488
    %v558 = vunpack.c.l.b16 %v489
    %v559 = vunpack.c.h.b16 %v489
    %v560 = vunpack.c.l.b16 %v490
    %v561 = vunpack.c.h.b16 %v490
    %v562 = vunpack.c.l.b16 %v491
    %v563 = vunpack.c.h.b16 %v491
    %v564 = vunpack.c.l.b16 %v492
    %v565 = vunpack.c.h.b16 %v492
    %v566 = vunpack.c.l.b16 %v493
    %v567 = vunpack.c.h.b16 %v493
    %v568 = vunpack.c.l.b16 %v494
    %v569 = vunpack.c.h.b16 %v494
    %v570 = vunpack.c.l.b16 %v495
    %v571 = vunpack.c.h.b16 %v495
    %v572 = vunpack.c.l.b16 %v496
    %v573 = vunpack.c.h.b16 %v496
    %v574 = vunpack.c.l.b16 %v497
    %v575 = vunpack.c.h.b16 %v497
    %v576 = vunpack.c.l.b16 %v498
    %v577 = vunpack.c.h.b16 %v498
    %v578 = vunpack.c.l.b16 %v499
    %v579 = vunpack.c.h.b16 %v499
    %v580 = vunpack.c.l.b16 %v500
    %v581 = vunpack.c.h.b16 %v500
    %v582 = vunpack.c.l.b16 %v501
    %v583 = vunpack.c.h.b16 %v501
    %v584 = vunpack.c.l.b16 %v502
    %v585 = vunpack.c.h.b16 %v502
    %v586 = vunpack.c.l.b16 %v503
    %v587 = vunpack.c.h.b16 %v503
    %v588 = vunpack.c.l.b16 %v504
    %v589 = vunpack.c.h.b16 %v504
    %v590 = vunpack.c.l.b16 %v505
    %v591 = vunpack.c.h.b16 %v505
    %v592 = vunpack.c.l.b16 %v506
    %v593 = vunpack.c.h.b16 %v506
    %v594 = vunpack.c.l.b16 %v507
    %v595 = vunpack.c.h.b16 %v507
    %v596 = vunpack.c.l.b16 %v508
    %v597 = vunpack.c.h.b16 %v508
    %v598 = vunpack.c.l.b16 %v509
    %v599 = vunpack.c.h.b16 %v509
    %v600 = vunpack.c.l.b16 %v510
    %v601 = vunpack.c.h.b16 %v510
    %v602 = vunpack.c.l.b16 %v511
    %v603 = vunpack.c.h.b16 %v511
    %v604 = vunpack.c.l.b16 %v512
    %v605 = vunpack.c.h.b16 %v512
    %v606 = vunpack.c.l.b16 %v513
    %v607 = vunpack.c.h.b16 %v513
    %v608 = vunpack.c.l.b16 %v514
    %v609 = vunpack.c.h.b16 %v514
    %v610 = vunpack.c.l.b16 %v515
    %v611 = vunpack.c.h.b16 %v515
    %v612 = vpack.c.b16 %v552, %v548
    %v613 = vpack.c.b16 %v553, %v549
    %v614 = vpack.c.b16 %v554, %v550
    %v615 = vpack.c.b16 %v555, %v551
    %v616 = vpack.c.b16 %v560, %v556
    %v617 = vpack.c.b16 %v561, %v557
    %v618 = vpack.c.b16 %v562, %v558
    %v619 = vpack.c.b16 %v563, %v559
    %v620 = vpack.c.b16 %v568, %v564
    %v621 = vpack.c.b16 %v569, %v565
    %v622 = vpack.c.b16 %v570, %v566
    %v623 = vpack.c.b16 %v571, %v567
    %v624 = vpack.c.b16 %v576, %v572
    %v625 = vpack.c.b16 %v577, %v573
    %v626 = vpack.c.b16 %v578, %v574
    %v627 = vpack.c.b16 %v579, %v575
    %v628 = vpack.c.b16 %v584, %v580
    %v629 = vpack.c.b16 %v585, %v581
    %v630 = vpack.c.b16 %v586, %v582
    %v631 = vpack.c.b16 %v587, %v583
    %v632 = vpack.c.b16 %v592, %v588
    %v633 = vpack.c.b16 %v593, %v589
    %v634 = vpack.c.b16 %v594, %v590
    %v635 = vpack.c.b16 %v595, %v591
    %v636 = vpack.c.b16 %v600, %v596
    %v637 = vpack.c.b16 %v601, %v597
    %v638 = vpack.c.b16 %v602, %v598
    %v639 = vpack.c.b16 %v603, %v599
    %v640 = vpack.c.b16 %v608, %v604
    %v641 = vpack.c.b16 %v609, %v605
    %v642 = vpack.c.b16 %v610, %v606
    %v643 = vpack.c.b16 %v611, %v607
    %676 = vmatpush.bf16.msra.mxu0 %v640
    %677 = vmatpush.bf16.msra.mxu0 %v636
    %678 = vmatpush.bf16.msra.mxu0 %v632
    %679 = vmatpush.bf16.msra.mxu0 %v628
    %680 = vmatpush.bf16.msra.mxu0 %v624
    %681 = vmatpush.bf16.msra.mxu0 %v620
    %682 = vmatpush.bf16.msra.mxu0 %v616
    %683 = vmatpush.bf16.msra.mxu0 %v612
    %684 = vmatmul.bf16.gmra.mxu0 0
    %v685 = vpop.f32.mrf.mxu0
    %v686 = vadd.f32 0.0, %v685
    %v687 = vpop.f32.mrf.mxu0
    %688 = vdwg.mxu0
    %689 = vmatpush.bf16.msra.mxu0 %v641
    %690 = vmatpush.bf16.msra.mxu0 %v637
    %691 = vmatpush.bf16.msra.mxu0 %v633
    %692 = vmatpush.bf16.msra.mxu0 %v629
    %693 = vmatpush.bf16.msra.mxu0 %v625
    %694 = vmatpush.bf16.msra.mxu0 %v621
    %695 = vmatpush.bf16.msra.mxu0 %v617
    %696 = vmatpush.bf16.msra.mxu0 %v613
    %697 = vmatmul.bf16.gmra.mxu0 0
    %v698 = vpop.f32.mrf.mxu0
    %v699 = vadd.f32 0.0, %v698
    %v700 = vpop.f32.mrf.mxu0
    %701 = vdwg.mxu0
    %702 = vmatpush.bf16.msra.mxu0 %v642
    %703 = vmatpush.bf16.msra.mxu0 %v638
    %704 = vmatpush.bf16.msra.mxu0 %v634
    %705 = vmatpush.bf16.msra.mxu0 %v630
    %706 = vmatpush.bf16.msra.mxu0 %v626
    %707 = vmatpush.bf16.msra.mxu0 %v622
    %708 = vmatpush.bf16.msra.mxu0 %v618
    %709 = vmatpush.bf16.msra.mxu0 %v614
    %710 = vmatmul.bf16.gmra.mxu0 0
    %v711 = vpop.f32.mrf.mxu0
    %v712 = vadd.f32 0.0, %v711
    %v713 = vpop.f32.mrf.mxu0
    %714 = vdwg.mxu0
    %715 = vmatpush.bf16.msra.mxu0 %v643
    %716 = vmatpush.bf16.msra.mxu0 %v639
    %717 = vmatpush.bf16.msra.mxu0 %v635
    %718 = vmatpush.bf16.msra.mxu0 %v631
    %719 = vmatpush.bf16.msra.mxu0 %v627
    %720 = vmatpush.bf16.msra.mxu0 %v623
    %721 = vmatpush.bf16.msra.mxu0 %v619
    %722 = vmatpush.bf16.msra.mxu0 %v615
    %723 = vmatmul.bf16.gmra.mxu0 0
    %v724 = vpop.f32.mrf.mxu0
    %v725 = vadd.f32 0.0, %v724
    %v726 = vpop.f32.mrf.mxu0
    %727 = vdwg.mxu0
    %v728 = vadd.f32 %v378, %v686
    %v729 = vadd.f32 %v407, %v699
    %v730 = vadd.f32 %v436, %v712
    %v731 = vadd.f32 %v465, %v725
    %v732 = vxor.u32 %v728, 2147483648
    %v733 = vxor.u32 %v729, 2147483648
    %v734 = vxor.u32 %v730, 2147483648
    %v735 = vmul.f32 %v732, 1.442695
    %v736 = vpow.pop %v735
    %v737 = vmul.f32 %v733, 1.442695
    %v738 = vpow.pop %v737
    %v739 = vmul.f32 %v734, 1.442695
    %v740 = vpow.pop %v739
    %v741 = vadd.f32 %v736, 1.0
    %v742 = vadd.f32 %v738, 1.0
    %v743 = vadd.f32 %v740, 1.0
    %v744 = vrcp.pop %v741
    %v745 = vmul.f32 %v741, %v744
    %v746 = vsub.f32 1.0, %v745
    %v747 = vmul.f32 %v744, %v746
    %v748 = vadd.f32 %v744, %v747
    %vm749 = vweird.f32 %v741
    %vm750 = vweird.f32 %v744
    %vm751 = vmor %vm749, %vm750
    %v752 = vsel %vm751, %v744, %v748
    %v753 = vand.u32 2147483647, %v741
    %vm754 = vcmp.eq.f32.partialorder %v753, 8.507059e+37
    %v755 = vand.u32 %v741, 2147483648
    %v756 = vor.u32 1.1754944e-38, %v755
    %v757 = vsel %vm754, %v756, %v752
    %v758 = vmul.f32 1.0, %v757
    %v759 = vrcp.pop %v742
    %v760 = vmul.f32 %v742, %v759
    %v761 = vsub.f32 1.0, %v760
    %v762 = vmul.f32 %v759, %v761
    %v763 = vadd.f32 %v759, %v762
    %vm764 = vweird.f32 %v742
    %vm765 = vweird.f32 %v759
    %vm766 = vmor %vm764, %vm765
    %v767 = vsel %vm766, %v759, %v763
    %v768 = vand.u32 2147483647, %v742
    %vm769 = vcmp.eq.f32.partialorder %v768, 8.507059e+37
    %v770 = vand.u32 %v742, 2147483648
    %v771 = vor.u32 1.1754944e-38, %v770
    %v772 = vsel %vm769, %v771, %v767
    %v773 = vmul.f32 1.0, %v772
    %v774 = vrcp.pop %v743
    %v775 = vmul.f32 %v743, %v774
    %v776 = vsub.f32 1.0, %v775
    %v777 = vmul.f32 %v774, %v776
    %v778 = vadd.f32 %v774, %v777
    %vm779 = vweird.f32 %v743
    %vm780 = vweird.f32 %v774
    %vm781 = vmor %vm779, %vm780
    %v782 = vsel %vm781, %v774, %v778
    %v783 = vand.u32 2147483647, %v743
    %vm784 = vcmp.eq.f32.partialorder %v783, 8.507059e+37
    %v785 = vand.u32 %v743, 2147483648
    %v786 = vor.u32 1.1754944e-38, %v785
    %v787 = vsel %vm784, %v786, %v782
    %v788 = vmul.f32 1.0, %v787
    %v789 = vtanh.pop %v731
    %v790 = vmul.f32 %v773, 0.0
    %v791 = vmul.f32 %v758, %v789
    %v792 = vadd.f32 %v790, %v791
    %v793 = vtanh.pop %v792
    %v794 = vmul.f32 %v788, %v793
    %v795 = vpack.c.bf16 %v794, %v794
    %796 = vmatpush.bf16.msra.mxu0 %v640
    %797 = vmatpush.bf16.msra.mxu0 %v636
    %798 = vmatpush.bf16.msra.mxu0 %v632
    %799 = vmatpush.bf16.msra.mxu0 %v628
    %800 = vmatpush.bf16.msra.mxu0 %v624
    %801 = vmatpush.bf16.msra.mxu0 %v620
    %802 = vmatpush.bf16.msra.mxu0 %v616
    %803 = vmatpush.bf16.msra.mxu0 %v612
    %804 = vmatmul.bf16.gmra.mxu0 %v795
    %v805 = vpop.f32.mrf.mxu0
    %v806 = vadd.f32 0.0, %v805
    %v807 = vpop.f32.mrf.mxu0
    %808 = vdwg.mxu0
    %809 = vmatpush.bf16.msra.mxu0 %v641
    %810 = vmatpush.bf16.msra.mxu0 %v637
    %811 = vmatpush.bf16.msra.mxu0 %v633
    %812 = vmatpush.bf16.msra.mxu0 %v629
    %813 = vmatpush.bf16.msra.mxu0 %v625
    %814 = vmatpush.bf16.msra.mxu0 %v621
    %815 = vmatpush.bf16.msra.mxu0 %v617
    %816 = vmatpush.bf16.msra.mxu0 %v613
    %817 = vmatmul.bf16.gmra.mxu0 %v795
    %v818 = vpop.f32.mrf.mxu0
    %v819 = vadd.f32 0.0, %v818
    %v820 = vpop.f32.mrf.mxu0
    %821 = vdwg.mxu0
    %822 = vmatpush.bf16.msra.mxu0 %v642
    %823 = vmatpush.bf16.msra.mxu0 %v638
    %824 = vmatpush.bf16.msra.mxu0 %v634
    %825 = vmatpush.bf16.msra.mxu0 %v630
    %826 = vmatpush.bf16.msra.mxu0 %v626
    %827 = vmatpush.bf16.msra.mxu0 %v622
    %828 = vmatpush.bf16.msra.mxu0 %v618
    %829 = vmatpush.bf16.msra.mxu0 %v614
    %830 = vmatmul.bf16.gmra.mxu0 %v795
    %v831 = vpop.f32.mrf.mxu0
    %v832 = vadd.f32 0.0, %v831
    %v833 = vpop.f32.mrf.mxu0
    %834 = vdwg.mxu0
    %835 = vmatpush.bf16.msra.mxu0 %v643
    %836 = vmatpush.bf16.msra.mxu0 %v639
    %837 = vmatpush.bf16.msra.mxu0 %v635
    %838 = vmatpush.bf16.msra.mxu0 %v631
    %839 = vmatpush.bf16.msra.mxu0 %v627
    %840 = vmatpush.bf16.msra.mxu0 %v623
    %841 = vmatpush.bf16.msra.mxu0 %v619
    %842 = vmatpush.bf16.msra.mxu0 %v615
    %843 = vmatmul.bf16.gmra.mxu0 %v795
    %v844 = vpop.f32.mrf.mxu0
    %v845 = vadd.f32 0.0, %v844
    %v846 = vpop.f32.mrf.mxu0
    %847 = vdwg.mxu0
    %v848 = vadd.f32 %v380, %v806
    %v849 = vadd.f32 %v409, %v819
    %v850 = vadd.f32 %v438, %v832
    %v851 = vadd.f32 %v467, %v845
    %v852 = vxor.u32 %v848, 2147483648
    %v853 = vxor.u32 %v849, 2147483648
    %v854 = vxor.u32 %v850, 2147483648
    %v855 = vmul.f32 %v852, 1.442695
    %v856 = vpow.pop %v855
    %v857 = vmul.f32 %v853, 1.442695
    %v858 = vpow.pop %v857
    %v859 = vmul.f32 %v854, 1.442695
    %v860 = vpow.pop %v859
    %v861 = vadd.f32 %v856, 1.0
    %v862 = vadd.f32 %v858, 1.0
    %v863 = vadd.f32 %v860, 1.0
    %v864 = vrcp.pop %v861
    %v865 = vmul.f32 %v861, %v864
    %v866 = vsub.f32 1.0, %v865
    %v867 = vmul.f32 %v864, %v866
    %v868 = vadd.f32 %v864, %v867
    %vm869 = vweird.f32 %v861
    %vm870 = vweird.f32 %v864
    %vm871 = vmor %vm869, %vm870
    %v872 = vsel %vm871, %v864, %v868
    %v873 = vand.u32 2147483647, %v861
    %vm874 = vcmp.eq.f32.partialorder %v873, 8.507059e+37
    %v875 = vand.u32 %v861, 2147483648
    %v876 = vor.u32 1.1754944e-38, %v875
    %v877 = vsel %vm874, %v876, %v872
    %v878 = vmul.f32 1.0, %v877
    %v879 = vrcp.pop %v862
    %v880 = vmul.f32 %v862, %v879
    %v881 = vsub.f32 1.0, %v880
    %v882 = vmul.f32 %v879, %v881
    %v883 = vadd.f32 %v879, %v882
    %vm884 = vweird.f32 %v862
    %vm885 = vweird.f32 %v879
    %vm886 = vmor %vm884, %vm885
    %v887 = vsel %vm886, %v879, %v883
    %v888 = vand.u32 2147483647, %v862
    %vm889 = vcmp.eq.f32.partialorder %v888, 8.507059e+37
    %v890 = vand.u32 %v862, 2147483648
    %v891 = vor.u32 1.1754944e-38, %v890
    %v892 = vsel %vm889, %v891, %v887
    %v893 = vmul.f32 1.0, %v892
    %v894 = vrcp.pop %v863
    %v895 = vmul.f32 %v863, %v894
    %v896 = vsub.f32 1.0, %v895
    %v897 = vmul.f32 %v894, %v896
    %v898 = vadd.f32 %v894, %v897
    %vm899 = vweird.f32 %v863
    %vm900 = vweird.f32 %v894
    %vm901 = vmor %vm899, %vm900
    %v902 = vsel %vm901, %v894, %v898
    %v903 = vand.u32 2147483647, %v863
    %vm904 = vcmp.eq.f32.partialorder %v903, 8.507059e+37
    %v905 = vand.u32 %v863, 2147483648
    %v906 = vor.u32 1.1754944e-38, %v905
    %v907 = vsel %vm904, %v906, %v902
    %v908 = vmul.f32 1.0, %v907
    %v909 = vtanh.pop %v851
    %v910 = vmul.f32 %v893, %v792
    %v911 = vmul.f32 %v878, %v909
    %v912 = vadd.f32 %v910, %v911
    %v913 = vtanh.pop %v912
    %v914 = vmul.f32 %v908, %v913
    %v915 = vpack.c.bf16 %v914, %v914
    %916 = vmatpush.bf16.msra.mxu0 %v640
    %917 = vmatpush.bf16.msra.mxu0 %v636
    %918 = vmatpush.bf16.msra.mxu0 %v632
    %919 = vmatpush.bf16.msra.mxu0 %v628
    %920 = vmatpush.bf16.msra.mxu0 %v624
    %921 = vmatpush.bf16.msra.mxu0 %v620
    %922 = vmatpush.bf16.msra.mxu0 %v616
    %923 = vmatpush.bf16.msra.mxu0 %v612
    %924 = vmatmul.bf16.gmra.mxu0 %v915
    %v925 = vpop.f32.mrf.mxu0
    %v926 = vadd.f32 0.0, %v925
    %v927 = vpop.f32.mrf.mxu0
    %928 = vdwg.mxu0
    %929 = vmatpush.bf16.msra.mxu0 %v641
    %930 = vmatpush.bf16.msra.mxu0 %v637
    %931 = vmatpush.bf16.msra.mxu0 %v633
    %932 = vmatpush.bf16.msra.mxu0 %v629
    %933 = vmatpush.bf16.msra.mxu0 %v625
    %934 = vmatpush.bf16.msra.mxu0 %v621
    %935 = vmatpush.bf16.msra.mxu0 %v617
    %936 = vmatpush.bf16.msra.mxu0 %v613
    %937 = vmatmul.bf16.gmra.mxu0 %v915
    %v938 = vpop.f32.mrf.mxu0
    %v939 = vadd.f32 0.0, %v938
    %v940 = vpop.f32.mrf.mxu0
    %941 = vdwg.mxu0
    %942 = vmatpush.bf16.msra.mxu0 %v642
    %943 = vmatpush.bf16.msra.mxu0 %v638
    %944 = vmatpush.bf16.msra.mxu0 %v634
    %945 = vmatpush.bf16.msra.mxu0 %v630
    %946 = vmatpush.bf16.msra.mxu0 %v626
    %947 = vmatpush.bf16.msra.mxu0 %v622
    %948 = vmatpush.bf16.msra.mxu0 %v618
    %949 = vmatpush.bf16.msra.mxu0 %v614
    %950 = vmatmul.bf16.gmra.mxu0 %v915
    %v951 = vpop.f32.mrf.mxu0
    %v952 = vadd.f32 0.0, %v951
    %v953 = vpop.f32.mrf.mxu0
    %954 = vdwg.mxu0
    %955 = vmatpush.bf16.msra.mxu0 %v643
    %956 = vmatpush.bf16.msra.mxu0 %v639
    %957 = vmatpush.bf16.msra.mxu0 %v635
    %958 = vmatpush.bf16.msra.mxu0 %v631
    %959 = vmatpush.bf16.msra.mxu0 %v627
    %960 = vmatpush.bf16.msra.mxu0 %v623
    %961 = vmatpush.bf16.msra.mxu0 %v619
    %962 = vmatpush.bf16.msra.mxu0 %v615
    %963 = vmatmul.bf16.gmra.mxu0 %v915
    %v964 = vpop.f32.mrf.mxu0
    %v965 = vadd.f32 0.0, %v964
    %v966 = vpop.f32.mrf.mxu0
    %967 = vdwg.mxu0
    %v968 = vadd.f32 %v383, %v926
    %v969 = vadd.f32 %v412, %v939
    %v970 = vadd.f32 %v441, %v952
    %v971 = vadd.f32 %v470, %v965
    %v972 = vxor.u32 %v968, 2147483648
    %v973 = vxor.u32 %v969, 2147483648
    %v974 = vxor.u32 %v970, 2147483648
    %v975 = vmul.f32 %v972, 1.442695
    %v976 = vpow.pop %v975
    %v977 = vmul.f32 %v973, 1.442695
    %v978 = vpow.pop %v977
    %v979 = vmul.f32 %v974, 1.442695
    %v980 = vpow.pop %v979
    %v981 = vadd.f32 %v976, 1.0
    %v982 = vadd.f32 %v978, 1.0
    %v983 = vadd.f32 %v980, 1.0
    %v984 = vrcp.pop %v981
    %v985 = vmul.f32 %v981, %v984
    %v986 = vsub.f32 1.0, %v985
    %v987 = vmul.f32 %v984, %v986
    %v988 = vadd.f32 %v984, %v987
    %vm989 = vweird.f32 %v981
    %vm990 = vweird.f32 %v984
    %vm991 = vmor %vm989, %vm990
    %v992 = vsel %vm991, %v984, %v988
    %v993 = vand.u32 2147483647, %v981
    %vm994 = vcmp.eq.f32.partialorder %v993, 8.507059e+37
    %v995 = vand.u32 %v981, 2147483648
    %v996 = vor.u32 1.1754944e-38, %v995
    %v997 = vsel %vm994, %v996, %v992
    %v998 = vmul.f32 1.0, %v997
    %v999 = vrcp.pop %v982
    %v1000 = vmul.f32 %v982, %v999
    %v1001 = vsub.f32 1.0, %v1000
    %v1002 = vmul.f32 %v999, %v1001
    %v1003 = vadd.f32 %v999, %v1002
    %vm1004 = vweird.f32 %v982
    %vm1005 = vweird.f32 %v999
    %vm1006 = vmor %vm1004, %vm1005
    %v1007 = vsel %vm1006, %v999, %v1003
    %v1008 = vand.u32 2147483647, %v982
    %vm1009 = vcmp.eq.f32.partialorder %v1008, 8.507059e+37
    %v1010 = vand.u32 %v982, 2147483648
    %v1011 = vor.u32 1.1754944e-38, %v1010
    %v1012 = vsel %vm1009, %v1011, %v1007
    %v1013 = vmul.f32 1.0, %v1012
    %v1014 = vrcp.pop %v983
    %v1015 = vmul.f32 %v983, %v1014
    %v1016 = vsub.f32 1.0, %v1015
    %v1017 = vmul.f32 %v1014, %v1016
    %v1018 = vadd.f32 %v1014, %v1017
    %vm1019 = vweird.f32 %v983
    %vm1020 = vweird.f32 %v1014
    %vm1021 = vmor %vm1019, %vm1020
    %v1022 = vsel %vm1021, %v1014, %v1018
    %v1023 = vand.u32 2147483647, %v983
    %vm1024 = vcmp.eq.f32.partialorder %v1023, 8.507059e+37
    %v1025 = vand.u32 %v983, 2147483648
    %v1026 = vor.u32 1.1754944e-38, %v1025
    %v1027 = vsel %vm1024, %v1026, %v1022
    %v1028 = vmul.f32 1.0, %v1027
    %v1029 = vtanh.pop %v971
    %v1030 = vmul.f32 %v1013, %v912
    %v1031 = vmul.f32 %v998, %v1029
    %v1032 = vadd.f32 %v1030, %v1031
    %v1033 = vtanh.pop %v1032
    %v1034 = vmul.f32 %v1028, %v1033
    %v1035 = vpack.c.bf16 %v1034, %v1034
    %1036 = vmatpush.bf16.msra.mxu0 %v640
    %1037 = vmatpush.bf16.msra.mxu0 %v636
    %1038 = vmatpush.bf16.msra.mxu0 %v632
    %1039 = vmatpush.bf16.msra.mxu0 %v628
    %1040 = vmatpush.bf16.msra.mxu0 %v624
    %1041 = vmatpush.bf16.msra.mxu0 %v620
    %1042 = vmatpush.bf16.msra.mxu0 %v616
    %1043 = vmatpush.bf16.msra.mxu0 %v612
    %1044 = vmatmul.bf16.gmra.mxu0 %v1035
    %v1045 = vpop.f32.mrf.mxu0
    %v1046 = vadd.f32 0.0, %v1045
    %v1047 = vpop.f32.mrf.mxu0
    %1048 = vdwg.mxu0
    %1049 = vmatpush.bf16.msra.mxu0 %v641
    %1050 = vmatpush.bf16.msra.mxu0 %v637
    %1051 = vmatpush.bf16.msra.mxu0 %v633
    %1052 = vmatpush.bf16.msra.mxu0 %v629
    %1053 = vmatpush.bf16.msra.mxu0 %v625
    %1054 = vmatpush.bf16.msra.mxu0 %v621
    %1055 = vmatpush.bf16.msra.mxu0 %v617
    %1056 = vmatpush.bf16.msra.mxu0 %v613
    %1057 = vmatmul.bf16.gmra.mxu0 %v1035
    %v1058 = vpop.f32.mrf.mxu0
    %v1059 = vadd.f32 0.0, %v1058
    %v1060 = vpop.f32.mrf.mxu0
    %1061 = vdwg.mxu0
    %1062 = vmatpush.bf16.msra.mxu0 %v642
    %1063 = vmatpush.bf16.msra.mxu0 %v638
    %1064 = vmatpush.bf16.msra.mxu0 %v634
    %1065 = vmatpush.bf16.msra.mxu0 %v630
    %1066 = vmatpush.bf16.msra.mxu0 %v626
    %1067 = vmatpush.bf16.msra.mxu0 %v622
    %1068 = vmatpush.bf16.msra.mxu0 %v618
    %1069 = vmatpush.bf16.msra.mxu0 %v614
    %1070 = vmatmul.bf16.gmra.mxu0 %v1035
    %v1071 = vpop.f32.mrf.mxu0
    %v1072 = vadd.f32 0.0, %v1071
    %v1073 = vpop.f32.mrf.mxu0
    %1074 = vdwg.mxu0
    %1075 = vmatpush.bf16.msra.mxu0 %v643
    %1076 = vmatpush.bf16.msra.mxu0 %v639
    %1077 = vmatpush.bf16.msra.mxu0 %v635
    %1078 = vmatpush.bf16.msra.mxu0 %v631
    %1079 = vmatpush.bf16.msra.mxu0 %v627
    %1080 = vmatpush.bf16.msra.mxu0 %v623
    %1081 = vmatpush.bf16.msra.mxu0 %v619
    %1082 = vmatpush.bf16.msra.mxu0 %v615
    %1083 = vmatmul.bf16.gmra.mxu0 %v1035
    %v1084 = vpop.f32.mrf.mxu0
    %v1085 = vadd.f32 0.0, %v1084
    %v1086 = vpop.f32.mrf.mxu0
    %1087 = vdwg.mxu0
    %v1088 = vadd.f32 %v385, %v1046
    %v1089 = vadd.f32 %v414, %v1059
    %v1090 = vadd.f32 %v443, %v1072
    %v1091 = vadd.f32 %v472, %v1085
    %v1092 = vxor.u32 %v1088, 2147483648
    %v1093 = vxor.u32 %v1089, 2147483648
    %v1094 = vxor.u32 %v1090, 2147483648
    %v1095 = vmul.f32 %v1092, 1.442695
    %v1096 = vpow.pop %v1095
    %v1097 = vmul.f32 %v1093, 1.442695
    %v1098 = vpow.pop %v1097
    %v1099 = vmul.f32 %v1094, 1.442695
    %v1100 = vpow.pop %v1099
    %v1101 = vadd.f32 %v1096, 1.0
    %v1102 = vadd.f32 %v1098, 1.0
    %v1103 = vadd.f32 %v1100, 1.0
    %v1104 = vrcp.pop %v1101
    %v1105 = vmul.f32 %v1101, %v1104
    %v1106 = vsub.f32 1.0, %v1105
    %v1107 = vmul.f32 %v1104, %v1106
    %v1108 = vadd.f32 %v1104, %v1107
    %vm1109 = vweird.f32 %v1101
    %vm1110 = vweird.f32 %v1104
    %vm1111 = vmor %vm1109, %vm1110
    %v1112 = vsel %vm1111, %v1104, %v1108
    %v1113 = vand.u32 2147483647, %v1101
    %vm1114 = vcmp.eq.f32.partialorder %v1113, 8.507059e+37
    %v1115 = vand.u32 %v1101, 2147483648
    %v1116 = vor.u32 1.1754944e-38, %v1115
    %v1117 = vsel %vm1114, %v1116, %v1112
    %v1118 = vmul.f32 1.0, %v1117
    %v1119 = vrcp.pop %v1102
    %v1120 = vmul.f32 %v1102, %v1119
    %v1121 = vsub.f32 1.0, %v1120
    %v1122 = vmul.f32 %v1119, %v1121
    %v1123 = vadd.f32 %v1119, %v1122
    %vm1124 = vweird.f32 %v1102
    %vm1125 = vweird.f32 %v1119
    %vm1126 = vmor %vm1124, %vm1125
    %v1127 = vsel %vm1126, %v1119, %v1123
    %v1128 = vand.u32 2147483647, %v1102
    %vm1129 = vcmp.eq.f32.partialorder %v1128, 8.507059e+37
    %v1130 = vand.u32 %v1102, 2147483648
    %v1131 = vor.u32 1.1754944e-38, %v1130
    %v1132 = vsel %vm1129, %v1131, %v1127
    %v1133 = vmul.f32 1.0, %v1132
    %v1134 = vrcp.pop %v1103
    %v1135 = vmul.f32 %v1103, %v1134
    %v1136 = vsub.f32 1.0, %v1135
    %v1137 = vmul.f32 %v1134, %v1136
    %v1138 = vadd.f32 %v1134, %v1137
    %vm1139 = vweird.f32 %v1103
    %vm1140 = vweird.f32 %v1134
    %vm1141 = vmor %vm1139, %vm1140
    %v1142 = vsel %vm1141, %v1134, %v1138
    %v1143 = vand.u32 2147483647, %v1103
    %vm1144 = vcmp.eq.f32.partialorder %v1143, 8.507059e+37
    %v1145 = vand.u32 %v1103, 2147483648
    %v1146 = vor.u32 1.1754944e-38, %v1145
    %v1147 = vsel %vm1144, %v1146, %v1142
    %v1148 = vmul.f32 1.0, %v1147
    %v1149 = vtanh.pop %v1091
    %v1150 = vmul.f32 %v1133, %v1032
    %v1151 = vmul.f32 %v1118, %v1149
    %v1152 = vadd.f32 %v1150, %v1151
    %v1153 = vtanh.pop %v1152
    %v1154 = vmul.f32 %v1148, %v1153
    %v1155 = vpack.c.bf16 %v1154, %v1154
    %1156 = vmatpush.bf16.msra.mxu0 %v640
    %1157 = vmatpush.bf16.msra.mxu0 %v636
    %1158 = vmatpush.bf16.msra.mxu0 %v632
    %1159 = vmatpush.bf16.msra.mxu0 %v628
    %1160 = vmatpush.bf16.msra.mxu0 %v624
    %1161 = vmatpush.bf16.msra.mxu0 %v620
    %1162 = vmatpush.bf16.msra.mxu0 %v616
    %1163 = vmatpush.bf16.msra.mxu0 %v612
    %1164 = vmatmul.bf16.gmra.mxu0 %v1155
    %v1165 = vpop.f32.mrf.mxu0
    %v1166 = vadd.f32 0.0, %v1165
    %v1167 = vpop.f32.mrf.mxu0
    %1168 = vdwg.mxu0
    %1169 = vmatpush.bf16.msra.mxu0 %v641
    %1170 = vmatpush.bf16.msra.mxu0 %v637
    %1171 = vmatpush.bf16.msra.mxu0 %v633
    %1172 = vmatpush.bf16.msra.mxu0 %v629
    %1173 = vmatpush.bf16.msra.mxu0 %v625
    %1174 = vmatpush.bf16.msra.mxu0 %v621
    %1175 = vmatpush.bf16.msra.mxu0 %v617
    %1176 = vmatpush.bf16.msra.mxu0 %v613
    %1177 = vmatmul.bf16.gmra.mxu0 %v1155
    %v1178 = vpop.f32.mrf.mxu0
    %v1179 = vadd.f32 0.0, %v1178
    %v1180 = vpop.f32.mrf.mxu0
    %1181 = vdwg.mxu0
    %1182 = vmatpush.bf16.msra.mxu0 %v642
    %1183 = vmatpush.bf16.msra.mxu0 %v638
    %1184 = vmatpush.bf16.msra.mxu0 %v634
    %1185 = vmatpush.bf16.msra.mxu0 %v630
    %1186 = vmatpush.bf16.msra.mxu0 %v626
    %1187 = vmatpush.bf16.msra.mxu0 %v622
    %1188 = vmatpush.bf16.msra.mxu0 %v618
    %1189 = vmatpush.bf16.msra.mxu0 %v614
    %1190 = vmatmul.bf16.gmra.mxu0 %v1155
    %v1191 = vpop.f32.mrf.mxu0
    %v1192 = vadd.f32 0.0, %v1191
    %v1193 = vpop.f32.mrf.mxu0
    %1194 = vdwg.mxu0
    %1195 = vmatpush.bf16.msra.mxu0 %v643
    %1196 = vmatpush.bf16.msra.mxu0 %v639
    %1197 = vmatpush.bf16.msra.mxu0 %v635
    %1198 = vmatpush.bf16.msra.mxu0 %v631
    %1199 = vmatpush.bf16.msra.mxu0 %v627
    %1200 = vmatpush.bf16.msra.mxu0 %v623
    %1201 = vmatpush.bf16.msra.mxu0 %v619
    %1202 = vmatpush.bf16.msra.mxu0 %v615
    %1203 = vmatmul.bf16.gmra.mxu0 %v1155
    %v1204 = vpop.f32.mrf.mxu0
    %v1205 = vadd.f32 0.0, %v1204
    %v1206 = vpop.f32.mrf.mxu0
    %1207 = vdwg.mxu0
    %v1208 = vadd.f32 %v388, %v1166
    %v1209 = vadd.f32 %v417, %v1179
    %v1210 = vadd.f32 %v446, %v1192
    %v1211 = vadd.f32 %v475, %v1205
    %v1212 = vxor.u32 %v1208, 2147483648
    %v1213 = vxor.u32 %v1209, 2147483648
    %v1214 = vxor.u32 %v1210, 2147483648
    %v1215 = vmul.f32 %v1212, 1.442695
    %v1216 = vpow.pop %v1215
    %v1217 = vmul.f32 %v1213, 1.442695
    %v1218 = vpow.pop %v1217
    %v1219 = vmul.f32 %v1214, 1.442695
    %v1220 = vpow.pop %v1219
    %v1221 = vadd.f32 %v1216, 1.0
    %v1222 = vadd.f32 %v1218, 1.0
    %v1223 = vadd.f32 %v1220, 1.0
    %v1224 = vrcp.pop %v1221
    %v1225 = vmul.f32 %v1221, %v1224
    %v1226 = vsub.f32 1.0, %v1225
    %v1227 = vmul.f32 %v1224, %v1226
    %v1228 = vadd.f32 %v1224, %v1227
    %vm1229 = vweird.f32 %v1221
    %vm1230 = vweird.f32 %v1224
    %vm1231 = vmor %vm1229, %vm1230
    %v1232 = vsel %vm1231, %v1224, %v1228
    %v1233 = vand.u32 2147483647, %v1221
    %vm1234 = vcmp.eq.f32.partialorder %v1233, 8.507059e+37
    %v1235 = vand.u32 %v1221, 2147483648
    %v1236 = vor.u32 1.1754944e-38, %v1235
    %v1237 = vsel %vm1234, %v1236, %v1232
    %v1238 = vmul.f32 1.0, %v1237
    %v1239 = vrcp.pop %v1222
    %v1240 = vmul.f32 %v1222, %v1239
    %v1241 = vsub.f32 1.0, %v1240
    %v1242 = vmul.f32 %v1239, %v1241
    %v1243 = vadd.f32 %v1239, %v1242
    %vm1244 = vweird.f32 %v1222
    %vm1245 = vweird.f32 %v1239
    %vm1246 = vmor %vm1244, %vm1245
    %v1247 = vsel %vm1246, %v1239, %v1243
    %v1248 = vand.u32 2147483647, %v1222
    %vm1249 = vcmp.eq.f32.partialorder %v1248, 8.507059e+37
    %v1250 = vand.u32 %v1222, 2147483648
    %v1251 = vor.u32 1.1754944e-38, %v1250
    %v1252 = vsel %vm1249, %v1251, %v1247
    %v1253 = vmul.f32 1.0, %v1252
    %v1254 = vrcp.pop %v1223
    %v1255 = vmul.f32 %v1223, %v1254
    %v1256 = vsub.f32 1.0, %v1255
    %v1257 = vmul.f32 %v1254, %v1256
    %v1258 = vadd.f32 %v1254, %v1257
    %vm1259 = vweird.f32 %v1223
    %vm1260 = vweird.f32 %v1254
    %vm1261 = vmor %vm1259, %vm1260
    %v1262 = vsel %vm1261, %v1254, %v1258
    %v1263 = vand.u32 2147483647, %v1223
    %vm1264 = vcmp.eq.f32.partialorder %v1263, 8.507059e+37
    %v1265 = vand.u32 %v1223, 2147483648
    %v1266 = vor.u32 1.1754944e-38, %v1265
    %v1267 = vsel %vm1264, %v1266, %v1262
    %v1268 = vmul.f32 1.0, %v1267
    %v1269 = vtanh.pop %v1211
    %v1270 = vmul.f32 %v1253, %v1152
    %v1271 = vmul.f32 %v1238, %v1269
    %v1272 = vadd.f32 %v1270, %v1271
    %v1273 = vtanh.pop %v1272
    %v1274 = vmul.f32 %v1268, %v1273
    %v1275 = vpack.c.bf16 %v1274, %v1274
    %1276 = vmatpush.bf16.msra.mxu0 %v640
    %1277 = vmatpush.bf16.msra.mxu0 %v636
    %1278 = vmatpush.bf16.msra.mxu0 %v632
    %1279 = vmatpush.bf16.msra.mxu0 %v628
    %1280 = vmatpush.bf16.msra.mxu0 %v624
    %1281 = vmatpush.bf16.msra.mxu0 %v620
    %1282 = vmatpush.bf16.msra.mxu0 %v616
    %1283 = vmatpush.bf16.msra.mxu0 %v612
    %1284 = vmatmul.bf16.gmra.mxu0 %v1275
    %v1285 = vpop.f32.mrf.mxu0
    %v1286 = vadd.f32 0.0, %v1285
    %v1287 = vpop.f32.mrf.mxu0
    %1288 = vdwg.mxu0
    %1289 = vmatpush.bf16.msra.mxu0 %v641
    %1290 = vmatpush.bf16.msra.mxu0 %v637
    %1291 = vmatpush.bf16.msra.mxu0 %v633
    %1292 = vmatpush.bf16.msra.mxu0 %v629
    %1293 = vmatpush.bf16.msra.mxu0 %v625
    %1294 = vmatpush.bf16.msra.mxu0 %v621
    %1295 = vmatpush.bf16.msra.mxu0 %v617
    %1296 = vmatpush.bf16.msra.mxu0 %v613
    %1297 = vmatmul.bf16.gmra.mxu0 %v1275
    %v1298 = vpop.f32.mrf.mxu0
    %v1299 = vadd.f32 0.0, %v1298
    %v1300 = vpop.f32.mrf.mxu0
    %1301 = vdwg.mxu0
    %1302 = vmatpush.bf16.msra.mxu0 %v642
    %1303 = vmatpush.bf16.msra.mxu0 %v638
    %1304 = vmatpush.bf16.msra.mxu0 %v634
    %1305 = vmatpush.bf16.msra.mxu0 %v630
    %1306 = vmatpush.bf16.msra.mxu0 %v626
    %1307 = vmatpush.bf16.msra.mxu0 %v622
    %1308 = vmatpush.bf16.msra.mxu0 %v618
    %1309 = vmatpush.bf16.msra.mxu0 %v614
    %1310 = vmatmul.bf16.gmra.mxu0 %v1275
    %v1311 = vpop.f32.mrf.mxu0
    %v1312 = vadd.f32 0.0, %v1311
    %v1313 = vpop.f32.mrf.mxu0
    %1314 = vdwg.mxu0
    %1315 = vmatpush.bf16.msra.mxu0 %v643
    %1316 = vmatpush.bf16.msra.mxu0 %v639
    %1317 = vmatpush.bf16.msra.mxu0 %v635
    %1318 = vmatpush.bf16.msra.mxu0 %v631
    %1319 = vmatpush.bf16.msra.mxu0 %v627
    %1320 = vmatpush.bf16.msra.mxu0 %v623
    %1321 = vmatpush.bf16.msra.mxu0 %v619
    %1322 = vmatpush.bf16.msra.mxu0 %v615
    %1323 = vmatmul.bf16.gmra.mxu0 %v1275
    %v1324 = vpop.f32.mrf.mxu0
    %v1325 = vadd.f32 0.0, %v1324
    %v1326 = vpop.f32.mrf.mxu0
    %1327 = vdwg.mxu0
    %v1328 = vadd.f32 %v390, %v1286
    %v1329 = vadd.f32 %v419, %v1299
    %v1330 = vadd.f32 %v448, %v1312
    %v1331 = vadd.f32 %v477, %v1325
    %v1332 = vxor.u32 %v1328, 2147483648
    %v1333 = vxor.u32 %v1329, 2147483648
    %v1334 = vxor.u32 %v1330, 2147483648
    %v1335 = vmul.f32 %v1332, 1.442695
    %v1336 = vpow.pop %v1335
    %v1337 = vmul.f32 %v1333, 1.442695
    %v1338 = vpow.pop %v1337
    %v1339 = vmul.f32 %v1334, 1.442695
    %v1340 = vpow.pop %v1339
    %v1341 = vadd.f32 %v1336, 1.0
    %v1342 = vadd.f32 %v1338, 1.0
    %v1343 = vadd.f32 %v1340, 1.0
    %v1344 = vrcp.pop %v1341
    %v1345 = vmul.f32 %v1341, %v1344
    %v1346 = vsub.f32 1.0, %v1345
    %v1347 = vmul.f32 %v1344, %v1346
    %v1348 = vadd.f32 %v1344, %v1347
    %vm1349 = vweird.f32 %v1341
    %vm1350 = vweird.f32 %v1344
    %vm1351 = vmor %vm1349, %vm1350
    %v1352 = vsel %vm1351, %v1344, %v1348
    %v1353 = vand.u32 2147483647, %v1341
    %vm1354 = vcmp.eq.f32.partialorder %v1353, 8.507059e+37
    %v1355 = vand.u32 %v1341, 2147483648
    %v1356 = vor.u32 1.1754944e-38, %v1355
    %v1357 = vsel %vm1354, %v1356, %v1352
    %v1358 = vmul.f32 1.0, %v1357
    %v1359 = vrcp.pop %v1342
    %v1360 = vmul.f32 %v1342, %v1359
    %v1361 = vsub.f32 1.0, %v1360
    %v1362 = vmul.f32 %v1359, %v1361
    %v1363 = vadd.f32 %v1359, %v1362
    %vm1364 = vweird.f32 %v1342
    %vm1365 = vweird.f32 %v1359
    %vm1366 = vmor %vm1364, %vm1365
    %v1367 = vsel %vm1366, %v1359, %v1363
    %v1368 = vand.u32 2147483647, %v1342
    %vm1369 = vcmp.eq.f32.partialorder %v1368, 8.507059e+37
    %v1370 = vand.u32 %v1342, 2147483648
    %v1371 = vor.u32 1.1754944e-38, %v1370
    %v1372 = vsel %vm1369, %v1371, %v1367
    %v1373 = vmul.f32 1.0, %v1372
    %v1374 = vrcp.pop %v1343
    %v1375 = vmul.f32 %v1343, %v1374
    %v1376 = vsub.f32 1.0, %v1375
    %v1377 = vmul.f32 %v1374, %v1376
    %v1378 = vadd.f32 %v1374, %v1377
    %vm1379 = vweird.f32 %v1343
    %vm1380 = vweird.f32 %v1374
    %vm1381 = vmor %vm1379, %vm1380
    %v1382 = vsel %vm1381, %v1374, %v1378
    %v1383 = vand.u32 2147483647, %v1343
    %vm1384 = vcmp.eq.f32.partialorder %v1383, 8.507059e+37
    %v1385 = vand.u32 %v1343, 2147483648
    %v1386 = vor.u32 1.1754944e-38, %v1385
    %v1387 = vsel %vm1384, %v1386, %v1382
    %v1388 = vmul.f32 1.0, %v1387
    %v1389 = vtanh.pop %v1331
    %v1390 = vmul.f32 %v1373, %v1272
    %v1391 = vmul.f32 %v1358, %v1389
    %v1392 = vadd.f32 %v1390, %v1391
    %v1393 = vtanh.pop %v1392
    %v1394 = vmul.f32 %v1388, %v1393
    %v1395 = vpack.c.bf16 %v1394, %v1394
    %1396 = vmatpush.bf16.msra.mxu0 %v640
    %1397 = vmatpush.bf16.msra.mxu0 %v636
    %1398 = vmatpush.bf16.msra.mxu0 %v632
    %1399 = vmatpush.bf16.msra.mxu0 %v628
    %1400 = vmatpush.bf16.msra.mxu0 %v624
    %1401 = vmatpush.bf16.msra.mxu0 %v620
    %1402 = vmatpush.bf16.msra.mxu0 %v616
    %1403 = vmatpush.bf16.msra.mxu0 %v612
    %1404 = vmatmul.bf16.gmra.mxu0 %v1395
    %v1405 = vpop.f32.mrf.mxu0
    %v1406 = vadd.f32 0.0, %v1405
    %v1407 = vpop.f32.mrf.mxu0
    %1408 = vdwg.mxu0
    %1409 = vmatpush.bf16.msra.mxu0 %v641
    %1410 = vmatpush.bf16.msra.mxu0 %v637
    %1411 = vmatpush.bf16.msra.mxu0 %v633
    %1412 = vmatpush.bf16.msra.mxu0 %v629
    %1413 = vmatpush.bf16.msra.mxu0 %v625
    %1414 = vmatpush.bf16.msra.mxu0 %v621
    %1415 = vmatpush.bf16.msra.mxu0 %v617
    %1416 = vmatpush.bf16.msra.mxu0 %v613
    %1417 = vmatmul.bf16.gmra.mxu0 %v1395
    %v1418 = vpop.f32.mrf.mxu0
    %v1419 = vadd.f32 0.0, %v1418
    %v1420 = vpop.f32.mrf.mxu0
    %1421 = vdwg.mxu0
    %1422 = vmatpush.bf16.msra.mxu0 %v642
    %1423 = vmatpush.bf16.msra.mxu0 %v638
    %1424 = vmatpush.bf16.msra.mxu0 %v634
    %1425 = vmatpush.bf16.msra.mxu0 %v630
    %1426 = vmatpush.bf16.msra.mxu0 %v626
    %1427 = vmatpush.bf16.msra.mxu0 %v622
    %1428 = vmatpush.bf16.msra.mxu0 %v618
    %1429 = vmatpush.bf16.msra.mxu0 %v614
    %1430 = vmatmul.bf16.gmra.mxu0 %v1395
    %v1431 = vpop.f32.mrf.mxu0
    %v1432 = vadd.f32 0.0, %v1431
    %v1433 = vpop.f32.mrf.mxu0
    %1434 = vdwg.mxu0
    %1435 = vmatpush.bf16.msra.mxu0 %v643
    %1436 = vmatpush.bf16.msra.mxu0 %v639
    %1437 = vmatpush.bf16.msra.mxu0 %v635
    %1438 = vmatpush.bf16.msra.mxu0 %v631
    %1439 = vmatpush.bf16.msra.mxu0 %v627
    %1440 = vmatpush.bf16.msra.mxu0 %v623
    %1441 = vmatpush.bf16.msra.mxu0 %v619
    %1442 = vmatpush.bf16.msra.mxu0 %v615
    %1443 = vmatmul.bf16.gmra.mxu0 %v1395
    %v1444 = vpop.f32.mrf.mxu0
    %v1445 = vadd.f32 0.0, %v1444
    %v1446 = vpop.f32.mrf.mxu0
    %1447 = vdwg.mxu0
    %v1448 = vadd.f32 %v393, %v1406
    %v1449 = vadd.f32 %v422, %v1419
    %v1450 = vadd.f32 %v451, %v1432
    %v1451 = vadd.f32 %v480, %v1445
    %v1452 = vxor.u32 %v1448, 2147483648
    %v1453 = vxor.u32 %v1449, 2147483648
    %v1454 = vxor.u32 %v1450, 2147483648
    %v1455 = vmul.f32 %v1452, 1.442695
    %v1456 = vpow.pop %v1455
    %v1457 = vmul.f32 %v1453, 1.442695
    %v1458 = vpow.pop %v1457
    %v1459 = vmul.f32 %v1454, 1.442695
    %v1460 = vpow.pop %v1459
    %v1461 = vadd.f32 %v1456, 1.0
    %v1462 = vadd.f32 %v1458, 1.0
    %v1463 = vadd.f32 %v1460, 1.0
    %v1464 = vrcp.pop %v1461
    %v1465 = vmul.f32 %v1461, %v1464
    %v1466 = vsub.f32 1.0, %v1465
    %v1467 = vmul.f32 %v1464, %v1466
    %v1468 = vadd.f32 %v1464, %v1467
    %vm1469 = vweird.f32 %v1461
    %vm1470 = vweird.f32 %v1464
    %vm1471 = vmor %vm1469, %vm1470
    %v1472 = vsel %vm1471, %v1464, %v1468
    %v1473 = vand.u32 2147483647, %v1461
    %vm1474 = vcmp.eq.f32.partialorder %v1473, 8.507059e+37
    %v1475 = vand.u32 %v1461, 2147483648
    %v1476 = vor.u32 1.1754944e-38, %v1475
    %v1477 = vsel %vm1474, %v1476, %v1472
    %v1478 = vmul.f32 1.0, %v1477
    %v1479 = vrcp.pop %v1462
    %v1480 = vmul.f32 %v1462, %v1479
    %v1481 = vsub.f32 1.0, %v1480
    %v1482 = vmul.f32 %v1479, %v1481
    %v1483 = vadd.f32 %v1479, %v1482
    %vm1484 = vweird.f32 %v1462
    %vm1485 = vweird.f32 %v1479
    %vm1486 = vmor %vm1484, %vm1485
    %v1487 = vsel %vm1486, %v1479, %v1483
    %v1488 = vand.u32 2147483647, %v1462
    %vm1489 = vcmp.eq.f32.partialorder %v1488, 8.507059e+37
    %v1490 = vand.u32 %v1462, 2147483648
    %v1491 = vor.u32 1.1754944e-38, %v1490
    %v1492 = vsel %vm1489, %v1491, %v1487
    %v1493 = vmul.f32 1.0, %v1492
    %v1494 = vrcp.pop %v1463
    %v1495 = vmul.f32 %v1463, %v1494
    %v1496 = vsub.f32 1.0, %v1495
    %v1497 = vmul.f32 %v1494, %v1496
    %v1498 = vadd.f32 %v1494, %v1497
    %vm1499 = vweird.f32 %v1463
    %vm1500 = vweird.f32 %v1494
    %vm1501 = vmor %vm1499, %vm1500
    %v1502 = vsel %vm1501, %v1494, %v1498
    %v1503 = vand.u32 2147483647, %v1463
    %vm1504 = vcmp.eq.f32.partialorder %v1503, 8.507059e+37
    %v1505 = vand.u32 %v1463, 2147483648
    %v1506 = vor.u32 1.1754944e-38, %v1505
    %v1507 = vsel %vm1504, %v1506, %v1502
    %v1508 = vmul.f32 1.0, %v1507
    %v1509 = vtanh.pop %v1451
    %v1510 = vmul.f32 %v1493, %v1392
    %v1511 = vmul.f32 %v1478, %v1509
    %v1512 = vadd.f32 %v1510, %v1511
    %v1513 = vtanh.pop %v1512
    %v1514 = vmul.f32 %v1508, %v1513
    %v1515 = vpack.c.bf16 %v1514, %v1514
    %1516 = vmatpush.bf16.msra.mxu0 %v640
    %1517 = vmatpush.bf16.msra.mxu0 %v636
    %1518 = vmatpush.bf16.msra.mxu0 %v632
    %1519 = vmatpush.bf16.msra.mxu0 %v628
    %1520 = vmatpush.bf16.msra.mxu0 %v624
    %1521 = vmatpush.bf16.msra.mxu0 %v620
    %1522 = vmatpush.bf16.msra.mxu0 %v616
    %1523 = vmatpush.bf16.msra.mxu0 %v612
    %1524 = vmatmul.bf16.gmra.mxu0 %v1515
    %v1525 = vpop.f32.mrf.mxu0
    %v1526 = vadd.f32 0.0, %v1525
    %v1527 = vpop.f32.mrf.mxu0
    %1528 = vdwg.mxu0
    %1529 = vmatpush.bf16.msra.mxu0 %v641
    %1530 = vmatpush.bf16.msra.mxu0 %v637
    %1531 = vmatpush.bf16.msra.mxu0 %v633
    %1532 = vmatpush.bf16.msra.mxu0 %v629
    %1533 = vmatpush.bf16.msra.mxu0 %v625
    %1534 = vmatpush.bf16.msra.mxu0 %v621
    %1535 = vmatpush.bf16.msra.mxu0 %v617
    %1536 = vmatpush.bf16.msra.mxu0 %v613
    %1537 = vmatmul.bf16.gmra.mxu0 %v1515
    %v1538 = vpop.f32.mrf.mxu0
    %v1539 = vadd.f32 0.0, %v1538
    %v1540 = vpop.f32.mrf.mxu0
    %1541 = vdwg.mxu0
    %1542 = vmatpush.bf16.msra.mxu0 %v642
    %1543 = vmatpush.bf16.msra.mxu0 %v638
    %1544 = vmatpush.bf16.msra.mxu0 %v634
    %1545 = vmatpush.bf16.msra.mxu0 %v630
    %1546 = vmatpush.bf16.msra.mxu0 %v626
    %1547 = vmatpush.bf16.msra.mxu0 %v622
    %1548 = vmatpush.bf16.msra.mxu0 %v618
    %1549 = vmatpush.bf16.msra.mxu0 %v614
    %1550 = vmatmul.bf16.gmra.mxu0 %v1515
    %v1551 = vpop.f32.mrf.mxu0
    %v1552 = vadd.f32 0.0, %v1551
    %v1553 = vpop.f32.mrf.mxu0
    %1554 = vdwg.mxu0
    %1555 = vmatpush.bf16.msra.mxu0 %v643
    %1556 = vmatpush.bf16.msra.mxu0 %v639
    %1557 = vmatpush.bf16.msra.mxu0 %v635
    %1558 = vmatpush.bf16.msra.mxu0 %v631
    %1559 = vmatpush.bf16.msra.mxu0 %v627
    %1560 = vmatpush.bf16.msra.mxu0 %v623
    %1561 = vmatpush.bf16.msra.mxu0 %v619
    %1562 = vmatpush.bf16.msra.mxu0 %v615
    %1563 = vmatmul.bf16.gmra.mxu0 %v1515
    %v1564 = vpop.f32.mrf.mxu0
    %v1565 = vadd.f32 0.0, %v1564
    %v1566 = vpop.f32.mrf.mxu0
    %1567 = vdwg.mxu0
    %v1568 = vadd.f32 %v395, %v1526
    %v1569 = vadd.f32 %v424, %v1539
    %v1570 = vadd.f32 %v453, %v1552
    %v1571 = vadd.f32 %v482, %v1565
    %v1572 = vxor.u32 %v1568, 2147483648
    %v1573 = vxor.u32 %v1569, 2147483648
    %v1574 = vxor.u32 %v1570, 2147483648
    %v1575 = vmul.f32 %v1572, 1.442695
    %v1576 = vpow.pop %v1575
    %v1577 = vmul.f32 %v1573, 1.442695
    %v1578 = vpow.pop %v1577
    %v1579 = vmul.f32 %v1574, 1.442695
    %v1580 = vpow.pop %v1579
    %v1581 = vadd.f32 %v1576, 1.0
    %v1582 = vadd.f32 %v1578, 1.0
    %v1583 = vadd.f32 %v1580, 1.0
    %v1584 = vrcp.pop %v1581
    %v1585 = vmul.f32 %v1581, %v1584
    %v1586 = vsub.f32 1.0, %v1585
    %v1587 = vmul.f32 %v1584, %v1586
    %v1588 = vadd.f32 %v1584, %v1587
    %vm1589 = vweird.f32 %v1581
    %vm1590 = vweird.f32 %v1584
    %vm1591 = vmor %vm1589, %vm1590
    %v1592 = vsel %vm1591, %v1584, %v1588
    %v1593 = vand.u32 2147483647, %v1581
    %vm1594 = vcmp.eq.f32.partialorder %v1593, 8.507059e+37
    %v1595 = vand.u32 %v1581, 2147483648
    %v1596 = vor.u32 1.1754944e-38, %v1595
    %v1597 = vsel %vm1594, %v1596, %v1592
    %v1598 = vmul.f32 1.0, %v1597
    %v1599 = vrcp.pop %v1582
    %v1600 = vmul.f32 %v1582, %v1599
    %v1601 = vsub.f32 1.0, %v1600
    %v1602 = vmul.f32 %v1599, %v1601
    %v1603 = vadd.f32 %v1599, %v1602
    %vm1604 = vweird.f32 %v1582
    %vm1605 = vweird.f32 %v1599
    %vm1606 = vmor %vm1604, %vm1605
    %v1607 = vsel %vm1606, %v1599, %v1603
    %v1608 = vand.u32 2147483647, %v1582
    %vm1609 = vcmp.eq.f32.partialorder %v1608, 8.507059e+37
    %v1610 = vand.u32 %v1582, 2147483648
    %v1611 = vor.u32 1.1754944e-38, %v1610
    %v1612 = vsel %vm1609, %v1611, %v1607
    %v1613 = vmul.f32 1.0, %v1612
    %v1614 = vrcp.pop %v1583
    %v1615 = vmul.f32 %v1583, %v1614
    %v1616 = vsub.f32 1.0, %v1615
    %v1617 = vmul.f32 %v1614, %v1616
    %v1618 = vadd.f32 %v1614, %v1617
    %vm1619 = vweird.f32 %v1583
    %vm1620 = vweird.f32 %v1614
    %vm1621 = vmor %vm1619, %vm1620
    %v1622 = vsel %vm1621, %v1614, %v1618
    %v1623 = vand.u32 2147483647, %v1583
    %vm1624 = vcmp.eq.f32.partialorder %v1623, 8.507059e+37
    %v1625 = vand.u32 %v1583, 2147483648
    %v1626 = vor.u32 1.1754944e-38, %v1625
    %v1627 = vsel %vm1624, %v1626, %v1622
    %v1628 = vmul.f32 1.0, %v1627
    %v1629 = vtanh.pop %v1571
    %v1630 = vmul.f32 %v1613, %v1512
    %v1631 = vmul.f32 %v1598, %v1629
    %v1632 = vadd.f32 %v1630, %v1631
    %v1633 = vtanh.pop %v1632
    %v1634 = vmul.f32 %v1628, %v1633
    %v1635 = vld [vmem:[%s6] sm:$0x3]
    %v1636 = vperm.slane %v1635, 0
    %v1637 = vmul.f32 %v1634, %v1636
    %1638 = vadd.xlane.f32.xlu0 %v1637
    %v1639 = vpop.xlane.xlu0 %1638
    %v1640 = vperm.slane %v1635, 1
    %v1641 = vmul.f32 %v1634, %v1640
    %1642 = vadd.xlane.f32.xlu0 %v1641
    %v1643 = vpop.xlane.xlu0 %1642
    %vm1644 = vcmask 7168
    %v1645 = vsel %vm1644, %v1639, %v1643
    %v1646 = vld [vmem:[%s7] sm:$0x1]
    %v1648 = vperm.slane %v1646, 0
    %v1650 = vadd.f32 %v1645, %v1648
    %vm1651 = vcmask 15360
    %v1652 = vsel %vm1651, %v1650, -inf
    %1653 = vmax.xlane.f32.xlu0 %v1652
    %v1654 = vpop.xlane.xlu0 %1653
    %v1655 = vsub.f32 %v1650, %v1654
    %v1656 = vmul.f32 %v1655, 1.442695
    %v1657 = vpow.pop %v1656
    %v1658 = vsel %vm1651, %v1657, 0.0
    %1659 = vadd.xlane.f32.xlu0 %v1658
    %v1660 = vpop.xlane.xlu0 %1659
    %v1661 = vrcp.pop %v1660
    %v1662 = vmul.f32 %v1657, %v1661
    %vm1663 = vcmask 9216
    %1664 = vst.msk [vmem:[#allocation7] sm:$0x3] %vm1663, %v1662
    // Predicated region
    $region42: #{tpu_custom_call.1} parent=1 // pred_check
      _
    $region43: #{tpu_custom_call.1} parent=1 // pred_check_branch
      %1666 = sbr.rel (0) target = $region45
    $region44: #{tpu_custom_call.1} parent=1 // pred_region
      %1668 = vsyncadd [#allocation4], 0
      %s1670 = sshll.u32 [#allocation7], 4
      %s1671 = int_to_ptr.vmem [resolvable:$true] %s1670
      %s1672 = sshll.u32 %s8, 4
      %s1673 = int_to_ptr.hbm [resolvable:$true] %s1672
      %1675 = dma.vmem_to_hbm [thread:$0]  %s1671, 32, %s1673, [#allocation4]
    $region45: #{tpu_custom_call.1} parent=1 // pred_fallthru
      _
    // Predicated region
    $region46: #{tpu_custom_call.1} parent=1 // pred_check
      _
    $region47: #{tpu_custom_call.1} parent=1 // pred_check_branch
      %1677 = sbr.rel (0) target = $region49
    $region48: #{tpu_custom_call.1} parent=1 // pred_region
      %1679 = dma.done [#allocation4], 32
    $region49: #{tpu_custom_call.1} parent=1 // pred_fallthru
      _
    %1680 = vsyncpa [#allocation3], 1
    %1681 = vsyncpa [#allocation6], 1
    %1682 = vsyncpa [#allocation4], 1

</llo_original>
